<compile_context>
chip_gen: v5e
topology: v5e:2x2
jax: 0.10.0
libtpu: 0.0.40
codegen_flags: <defaults>
</compile_context>

<pallas_src>
from functools import partial

import jax
import jax.numpy as jnp
from jax.experimental import pallas as pl
from jax.experimental.pallas import tpu as pltpu


def _fcn_kernel(n_layers, x_ref, *refs):
    """Fused MLP forward for one batch tile.

    x_ref : (batch_tile, n_input)  -- batch-major, as stored in HBM.
    refs  = (w0, b0, w1, b1, ..., wL, bL, out_ref)
      w_i : (out_i, in_i)  bf16   (torch layout)
      b_i : (out_i, 1)     f32    (broadcast over the lane/batch axis)
    out_ref : (n_summary, batch_tile)  -- lane-dense (batch on the 128 lanes).
    Hidden layers are followed by SiLU; the last layer is a plain affine map.
    """
    out_ref = refs[-1]
    params = refs[:-1]

    # Layer 0: contract over n_input directly from the batch-major x tile
    # (rhs-transposed matmul on the MXU) -> (out0, batch_tile) lane-dense
    # layout that every later layer reuses.  No materialized transpose.
    x_bf = x_ref[...].astype(jnp.bfloat16)

    h = None
    for layer in range(n_layers):
        w = params[2 * layer][...]          # (out, in)  bf16
        b = params[2 * layer + 1][...]      # (out, 1)   f32
        if layer == 0:
            acc = jax.lax.dot_general(
                w, x_bf,
                dimension_numbers=(((1,), (1,)), ((), ())),
                preferred_element_type=jnp.float32)      # (out0, batch_tile)
        else:
            acc = jnp.dot(w, h, preferred_element_type=jnp.float32)
        z = acc + b                                      # f32, lane broadcast
        if layer < n_layers - 1:
            # SiLU(x) = x * sigmoid(x); sigmoid on the EUP, mul on the VPU.
            z = z * jax.nn.sigmoid(z)
            h = z.astype(jnp.bfloat16)                   # bf16 MXU operand
        else:
            h = z
    out_ref[...] = h.astype(out_ref.dtype)


def _pick_batch_tile(batch):
    """Few, large grid steps (step overhead dominates this tiny kernel), but
    keep >= 2 steps when the batch allows so v7x's two TensorCores both work.
    Tiles are multiples of 256 lanes and capped at 2048 (<1.5 MiB activations,
    trivially inside v5e/v6e 128 MiB and v7x 64 MiB VMEM)."""
    b256 = pl.cdiv(batch, 256) * 256
    if b256 <= 256:
        return 256
    tile = min(2048, b256 // 2)
    return max(256, (tile // 256) * 256)


def fcn_forward(x, weights, biases, *, batch_tile=None, feature_major_out=False):
    """Run the fused FCN forward pass.

    Args:
      x:        (B, n_input) input summaries (f32 or bf16).
      weights:  list of torch-layout (out_i, in_i) matrices.
      biases:   list of (out_i,) bias vectors.
      batch_tile: lanes per grid step (multiple of 128); None = auto.
      feature_major_out: if True, return (n_summary, B) straight from the
        kernel (no wrapper transpose) for consumers that accept that layout.

    Returns:
      (B, n_summary) array in x.dtype (or (n_summary, B) if feature_major_out).
    """
    B, n_input = x.shape
    n_layers = len(weights)
    n_summary = weights[-1].shape[0]

    if batch_tile is None:
        batch_tile = _pick_batch_tile(B)
    assert batch_tile % 128 == 0, "batch_tile must be a multiple of 128 lanes"
    num_tiles = pl.cdiv(B, batch_tile)   # ragged last tile handled by masking

    # bf16 weights for full-rate MXU; f32 column biases for lane broadcast.
    params = []
    for w, b in zip(weights, biases):
        params.append(w.astype(jnp.bfloat16))                 # (out, in)
        params.append(b.reshape(-1, 1).astype(jnp.float32))   # (out, 1)

    # x read batch-major; output written lane-dense (batch on the lane axis).
    x_spec = pl.BlockSpec((batch_tile, n_input), lambda i: (i, 0))
    out_spec = pl.BlockSpec((n_summary, batch_tile), lambda i: (0, i))

    # Cost hint so XLA can overlap this tiny, overhead-dominated custom call.
    dims = [n_input] + [w.shape[0] for w in weights]
    flops = 2 * B * sum(a * b for a, b in zip(dims[:-1], dims[1:]))
    transcendentals = B * sum(dims[1:-1])
    bytes_accessed = (
        B * (n_input + n_summary) * x.dtype.itemsize
        + sum(int(p.size) * p.dtype.itemsize for p in params))
    cost = pl.CostEstimate(flops=int(flops),
                           transcendentals=int(transcendentals),
                           bytes_accessed=int(bytes_accessed))

    def _run(single_buffer_params):
        pspecs = []
        for p in params:
            if single_buffer_params:
                # Constant index_map -> a second pipeline buffer is pure waste.
                pspecs.append(pl.BlockSpec(p.shape, lambda i: (0, 0),
                                           pipeline_mode=pl.Buffered(1)))
            else:
                pspecs.append(pl.BlockSpec(p.shape, lambda i: (0, 0)))
        return pl.pallas_call(
            partial(_fcn_kernel, n_layers),
            out_shape=jax.ShapeDtypeStruct((n_summary, B), x.dtype),
            grid_spec=pltpu.PrefetchScalarGridSpec(
                num_scalar_prefetch=0,
                grid=(num_tiles,),
                in_specs=[x_spec] + pspecs,
                out_specs=out_spec,
            ),
            compiler_params=pltpu.CompilerParams(
                dimension_semantics=("parallel",),
            ),
            cost_estimate=cost,
        )(x, *params)

    try:
        out_t = _run(True)
    except Exception:
        # Older JAX may not honor pipeline_mode on this code path; the default
        # double-buffered params are only a few KiB of extra VMEM.
        out_t = _run(False)

    if feature_major_out:
        return out_t                       # (n_summary, B), no wrapper pass
    return jnp.transpose(out_t)            # small (n_summary, B) -> (B, n_summary)


def init_fcn_params(key, n_input, n_hidden, n_summary, dtype=jnp.float32):
    """Deterministic init mirroring nn.Linear's default U(-1/sqrt(fan_in), ...).

    Weights in torch layout (out, in); biases as (out,).
    """
    dims = [n_input] + list(n_hidden) + [n_summary]
    weights, biases = [], []
    for i in range(len(dims) - 1):
        fan_in, fan_out = dims[i], dims[i + 1]
        key, kw, kb = jax.random.split(key, 3)
        bound = 1.0 / jnp.sqrt(fan_in)
        w = jax.random.uniform(kw, (fan_out, fan_in), dtype, -bound, bound)
        b = jax.random.uniform(kb, (fan_out,), dtype, -bound, bound)
        weights.append(w)
        biases.append(b)
    return weights, biases


def fcn_reference(x, weights, biases):
    """Plain-JAX f32 reference of the same forward pass (torch semantics)."""
    h = x.astype(jnp.float32)
    n_layers = len(weights)
    for i, (w, b) in enumerate(zip(weights, biases)):
        h = h @ jnp.transpose(w).astype(jnp.float32) + b.astype(jnp.float32)
        if i < n_layers - 1:
            h = h * jax.nn.sigmoid(h)
    return h.astype(x.dtype)


if __name__ == "__main__":
    key = jax.random.PRNGKey(0)

    # Shapes consistent with the module: FCN(n_summary=16, n_hidden=[64, 32]),
    # then initalize_model(n_input=32).  batch=512 -> auto tile 256, 2-step
    # parallel grid (both v7x TensorCores busy; only 2 steps on v5e/v6e).
    batch, n_input = 512, 32
    n_hidden = [64, 32]
    n_summary = 16

    key, kx, kp = jax.random.split(key, 3)
    x = jax.random.normal(kx, (batch, n_input), jnp.float32)
    weights, biases = init_fcn_params(kp, n_input, n_hidden, n_summary)

    out = jax.block_until_ready(fcn_forward(x, weights, biases))
    ref = fcn_reference(x, weights, biases)
    assert out.shape == (batch, n_summary)
    # bf16 MXU operands (f32 accumulation) vs pure-f32 reference -> loose tol.
    assert jnp.allclose(out, ref, atol=2e-2, rtol=2e-2), "mismatch vs reference"

    # Ragged-batch path (B not a multiple of the tile): masked last tile.
    x_small = x[:100]
    out_small = jax.block_until_ready(fcn_forward(x_small, weights, biases))
    ref_small = fcn_reference(x_small, weights, biases)
    assert out_small.shape == (100, n_summary)
    assert jnp.allclose(out_small, ref_small, atol=2e-2, rtol=2e-2), \
        "mismatch vs reference (ragged batch)"

    # Feature-major output path (no wrapper transpose at all).
    out_fm = jax.block_until_ready(
        fcn_forward(x, weights, biases, feature_major_out=True))
    assert out_fm.shape == (n_summary, batch)
    assert jnp.allclose(jnp.transpose(out_fm), ref, atol=2e-2, rtol=2e-2), \
        "mismatch vs reference (feature-major output)"

    print("KERNEL_OK")
</pallas_src>

<mosaic_0001>
module attributes {stable_mosaic.version = 11 : i64} {
  func.func @_fcn_kernel(%arg0: i32, %arg1: memref<256x32xf32, #tpu.memory_space<vmem>>, %arg2: memref<64x32xbf16, #tpu.memory_space<vmem>>, %arg3: memref<64x1xf32, #tpu.memory_space<vmem>>, %arg4: memref<32x64xbf16, #tpu.memory_space<vmem>>, %arg5: memref<32x1xf32, #tpu.memory_space<vmem>>, %arg6: memref<16x32xbf16, #tpu.memory_space<vmem>>, %arg7: memref<16x1xf32, #tpu.memory_space<vmem>>, %arg8: memref<16x256xf32, #tpu.memory_space<vmem>>) attributes {dimension_semantics = [#tpu.dimension_semantics<parallel>], iteration_bounds = array<i64: 2>, scalar_prefetch = 0 : i64, scratch_operands = 0 : i64, tpu.core_type = #tpu.core_type<tc>, window_params = [{transform_indices = @transform_0, window_bounds = array<i64: 256, 32>}, {pipeline_mode = #tpu.pipeline_mode<synchronous>, transform_indices = @transform_1, window_bounds = array<i64: 64, 32>}, {pipeline_mode = #tpu.pipeline_mode<synchronous>, transform_indices = @transform_2, window_bounds = array<i64: 64, 1>}, {pipeline_mode = #tpu.pipeline_mode<synchronous>, transform_indices = @transform_3, window_bounds = array<i64: 32, 64>}, {pipeline_mode = #tpu.pipeline_mode<synchronous>, transform_indices = @transform_4, window_bounds = array<i64: 32, 1>}, {pipeline_mode = #tpu.pipeline_mode<synchronous>, transform_indices = @transform_5, window_bounds = array<i64: 16, 32>}, {pipeline_mode = #tpu.pipeline_mode<synchronous>, transform_indices = @transform_6, window_bounds = array<i64: 16, 1>}, {transform_indices = @transform_7, window_bounds = array<i64: 16, 256>}]} {
    %c0 = arith.constant 0 : index
    %c0_0 = arith.constant 0 : index
    %0 = vector.load %arg1[%c0, %c0_0] : memref<256x32xf32, #tpu.memory_space<vmem>>, vector<256x32xf32>
    %1 = arith.truncf %0 : vector<256x32xf32> to vector<256x32xbf16>
    %c0_1 = arith.constant 0 : index
    %c0_2 = arith.constant 0 : index
    %2 = vector.load %arg2[%c0_1, %c0_2] : memref<64x32xbf16, #tpu.memory_space<vmem>>, vector<64x32xbf16>
    %c0_3 = arith.constant 0 : index
    %c0_4 = arith.constant 0 : index
    %3 = vector.load %arg3[%c0_3, %c0_4] : memref<64x1xf32, #tpu.memory_space<vmem>>, vector<64x1xf32>
    %cst = arith.constant dense<0.000000e+00> : vector<64x256xf32>
    %4 = tpu.matmul %2, %1, %cst {dimension_numbers = #tpu.dot_dimension_numbers<[1], [1], [0], [0], [0, 0, 1, 0], [], []>} : vector<64x32xbf16>, vector<256x32xbf16>, vector<64x256xf32> -> vector<64x256xf32>
    %5 = vector.broadcast %3 : vector<64x1xf32> to vector<64x256xf32>
    %6 = arith.addf %4, %5 : vector<64x256xf32>
    %7 = arith.negf %6 : vector<64x256xf32>
    %8 = math.exp %7 : vector<64x256xf32>
    %cst_5 = arith.constant 1.000000e+00 : f32
    %9 = vector.broadcast %cst_5 : f32 to vector<64x256xf32>
    %10 = arith.addf %9, %8 : vector<64x256xf32>
    %11 = arith.divf %9, %10 : vector<64x256xf32>
    %12 = arith.mulf %6, %11 : vector<64x256xf32>
    %13 = arith.truncf %12 : vector<64x256xf32> to vector<64x256xbf16>
    %c0_6 = arith.constant 0 : index
    %c0_7 = arith.constant 0 : index
    %14 = vector.load %arg4[%c0_6, %c0_7] : memref<32x64xbf16, #tpu.memory_space<vmem>>, vector<32x64xbf16>
    %c0_8 = arith.constant 0 : index
    %c0_9 = arith.constant 0 : index
    %15 = vector.load %arg5[%c0_8, %c0_9] : memref<32x1xf32, #tpu.memory_space<vmem>>, vector<32x1xf32>
    %cst_10 = arith.constant dense<0.000000e+00> : vector<32x256xf32>
    %16 = tpu.matmul %14, %13, %cst_10 {dimension_numbers = #tpu.dot_dimension_numbers<[1], [0], [0], [1], [0, 0, 1, 1], [], []>} : vector<32x64xbf16>, vector<64x256xbf16>, vector<32x256xf32> -> vector<32x256xf32>
    %17 = vector.broadcast %15 : vector<32x1xf32> to vector<32x256xf32>
    %18 = arith.addf %16, %17 : vector<32x256xf32>
    %19 = arith.negf %18 : vector<32x256xf32>
    %20 = math.exp %19 : vector<32x256xf32>
    %cst_11 = arith.constant 1.000000e+00 : f32
    %21 = vector.broadcast %cst_11 : f32 to vector<32x256xf32>
    %22 = arith.addf %21, %20 : vector<32x256xf32>
    %23 = arith.divf %21, %22 : vector<32x256xf32>
    %24 = arith.mulf %18, %23 : vector<32x256xf32>
    %25 = arith.truncf %24 : vector<32x256xf32> to vector<32x256xbf16>
    %c0_12 = arith.constant 0 : index
    %c0_13 = arith.constant 0 : index
    %26 = vector.load %arg6[%c0_12, %c0_13] : memref<16x32xbf16, #tpu.memory_space<vmem>>, vector<16x32xbf16>
    %c0_14 = arith.constant 0 : index
    %c0_15 = arith.constant 0 : index
    %27 = vector.load %arg7[%c0_14, %c0_15] : memref<16x1xf32, #tpu.memory_space<vmem>>, vector<16x1xf32>
    %cst_16 = arith.constant dense<0.000000e+00> : vector<16x256xf32>
    %28 = tpu.matmul %26, %25, %cst_16 {dimension_numbers = #tpu.dot_dimension_numbers<[1], [0], [0], [1], [0, 0, 1, 1], [], []>} : vector<16x32xbf16>, vector<32x256xbf16>, vector<16x256xf32> -> vector<16x256xf32>
    %29 = vector.broadcast %27 : vector<16x1xf32> to vector<16x256xf32>
    %30 = arith.addf %28, %29 : vector<16x256xf32>
    %c0_17 = arith.constant 0 : index
    %c0_18 = arith.constant 0 : index
    %31 = vector.load %arg8[%c0_17, %c0_18] : memref<16x256xf32, #tpu.memory_space<vmem>>, vector<16x256xf32>
    tpu.vector_store %arg8[%c0_17, %c0_18], %30 {strides = array<i32>} : memref<16x256xf32, #tpu.memory_space<vmem>>, vector<16x256xf32>,
    return
  }
  func.func @transform_0(%arg0: i32) -> (i32, i32) {
    %c0_i32 = arith.constant 0 : i32
    %c0_i32_0 = arith.constant 0 : i32
    return %arg0, %c0_i32 : i32, i32
  }
  func.func @transform_1(%arg0: i32) -> (i32, i32) {
    %c0_i32 = arith.constant 0 : i32
    %c0_i32_0 = arith.constant 0 : i32
    %c0_i32_1 = arith.constant 0 : i32
    return %c0_i32, %c0_i32_0 : i32, i32
  }
  func.func @transform_2(%arg0: i32) -> (i32, i32) {
    %c0_i32 = arith.constant 0 : i32
    %c0_i32_0 = arith.constant 0 : i32
    %c0_i32_1 = arith.constant 0 : i32
    return %c0_i32, %c0_i32_0 : i32, i32
  }
  func.func @transform_3(%arg0: i32) -> (i32, i32) {
    %c0_i32 = arith.constant 0 : i32
    %c0_i32_0 = arith.constant 0 : i32
    %c0_i32_1 = arith.constant 0 : i32
    return %c0_i32, %c0_i32_0 : i32, i32
  }
  func.func @transform_4(%arg0: i32) -> (i32, i32) {
    %c0_i32 = arith.constant 0 : i32
    %c0_i32_0 = arith.constant 0 : i32
    %c0_i32_1 = arith.constant 0 : i32
    return %c0_i32, %c0_i32_0 : i32, i32
  }
  func.func @transform_5(%arg0: i32) -> (i32, i32) {
    %c0_i32 = arith.constant 0 : i32
    %c0_i32_0 = arith.constant 0 : i32
    %c0_i32_1 = arith.constant 0 : i32
    return %c0_i32, %c0_i32_0 : i32, i32
  }
  func.func @transform_6(%arg0: i32) -> (i32, i32) {
    %c0_i32 = arith.constant 0 : i32
    %c0_i32_0 = arith.constant 0 : i32
    %c0_i32_1 = arith.constant 0 : i32
    return %c0_i32, %c0_i32_0 : i32, i32
  }
  func.func @transform_7(%arg0: i32) -> (i32, i32) {
    %c0_i32 = arith.constant 0 : i32
    %c0_i32_0 = arith.constant 0 : i32
    return %c0_i32, %arg0 : i32, i32
  }
}

module attributes {stable_mosaic.version = 11 : i64} {
  func.func @_fcn_kernel(%arg0: i32, %arg1: memref<256x32xf32, #tpu.memory_space<vmem>>, %arg2: memref<64x32xbf16, #tpu.memory_space<vmem>>, %arg3: memref<64x1xf32, #tpu.memory_space<vmem>>, %arg4: memref<32x64xbf16, #tpu.memory_space<vmem>>, %arg5: memref<32x1xf32, #tpu.memory_space<vmem>>, %arg6: memref<16x32xbf16, #tpu.memory_space<vmem>>, %arg7: memref<16x1xf32, #tpu.memory_space<vmem>>, %arg8: memref<16x256xf32, #tpu.memory_space<vmem>>) attributes {dimension_semantics = [#tpu.dimension_semantics<parallel>], iteration_bounds = array<i64: 2>, scalar_prefetch = 0 : i64, scratch_operands = 0 : i64, tpu.core_type = #tpu.core_type<tc>, window_params = [{transform_indices = @transform_0, window_bounds = array<i64: 256, 32>}, {pipeline_mode = #tpu.pipeline_mode<synchronous>, transform_indices = @transform_1, window_bounds = array<i64: 64, 32>}, {pipeline_mode = #tpu.pipeline_mode<synchronous>, transform_indices = @transform_2, window_bounds = array<i64: 64, 1>}, {pipeline_mode = #tpu.pipeline_mode<synchronous>, transform_indices = @transform_3, window_bounds = array<i64: 32, 64>}, {pipeline_mode = #tpu.pipeline_mode<synchronous>, transform_indices = @transform_4, window_bounds = array<i64: 32, 1>}, {pipeline_mode = #tpu.pipeline_mode<synchronous>, transform_indices = @transform_5, window_bounds = array<i64: 16, 32>}, {pipeline_mode = #tpu.pipeline_mode<synchronous>, transform_indices = @transform_6, window_bounds = array<i64: 16, 1>}, {transform_indices = @transform_7, window_bounds = array<i64: 16, 256>}]} {
    %c0 = arith.constant 0 : index
    %c0_0 = arith.constant 0 : index
    %0 = vector.load %arg1[%c0, %c0_0] : memref<256x32xf32, #tpu.memory_space<vmem>>, vector<256x32xf32>
    %1 = arith.truncf %0 : vector<256x32xf32> to vector<256x32xbf16>
    %c0_1 = arith.constant 0 : index
    %c0_2 = arith.constant 0 : index
    %2 = vector.load %arg2[%c0_1, %c0_2] : memref<64x32xbf16, #tpu.memory_space<vmem>>, vector<64x32xbf16>
    %c0_3 = arith.constant 0 : index
    %c0_4 = arith.constant 0 : index
    %3 = vector.load %arg3[%c0_3, %c0_4] : memref<64x1xf32, #tpu.memory_space<vmem>>, vector<64x1xf32>
    %cst = arith.constant dense<0.000000e+00> : vector<64x256xf32>
    %4 = tpu.matmul %2, %1, %cst {dimension_numbers = #tpu.dot_dimension_numbers<[1], [1], [0], [0], [0, 0, 1, 0], [], []>} : vector<64x32xbf16>, vector<256x32xbf16>, vector<64x256xf32> -> vector<64x256xf32>
    %5 = vector.broadcast %3 : vector<64x1xf32> to vector<64x256xf32>
    %6 = arith.addf %4, %5 : vector<64x256xf32>
    %7 = arith.negf %6 : vector<64x256xf32>
    %8 = math.exp %7 : vector<64x256xf32>
    %cst_5 = arith.constant 1.000000e+00 : f32
    %9 = vector.broadcast %cst_5 : f32 to vector<64x256xf32>
    %10 = arith.addf %9, %8 : vector<64x256xf32>
    %11 = arith.divf %9, %10 : vector<64x256xf32>
    %12 = arith.mulf %6, %11 : vector<64x256xf32>
    %13 = arith.truncf %12 : vector<64x256xf32> to vector<64x256xbf16>
    %c0_6 = arith.constant 0 : index
    %c0_7 = arith.constant 0 : index
    %14 = vector.load %arg4[%c0_6, %c0_7] : memref<32x64xbf16, #tpu.memory_space<vmem>>, vector<32x64xbf16>
    %c0_8 = arith.constant 0 : index
    %c0_9 = arith.constant 0 : index
    %15 = vector.load %arg5[%c0_8, %c0_9] : memref<32x1xf32, #tpu.memory_space<vmem>>, vector<32x1xf32>
    %cst_10 = arith.constant dense<0.000000e+00> : vector<32x256xf32>
    %16 = tpu.matmul %14, %13, %cst_10 {dimension_numbers = #tpu.dot_dimension_numbers<[1], [0], [0], [1], [0, 0, 1, 1], [], []>} : vector<32x64xbf16>, vector<64x256xbf16>, vector<32x256xf32> -> vector<32x256xf32>
    %17 = vector.broadcast %15 : vector<32x1xf32> to vector<32x256xf32>
    %18 = arith.addf %16, %17 : vector<32x256xf32>
    %19 = arith.negf %18 : vector<32x256xf32>
    %20 = math.exp %19 : vector<32x256xf32>
    %cst_11 = arith.constant 1.000000e+00 : f32
    %21 = vector.broadcast %cst_11 : f32 to vector<32x256xf32>
    %22 = arith.addf %21, %20 : vector<32x256xf32>
    %23 = arith.divf %21, %22 : vector<32x256xf32>
    %24 = arith.mulf %18, %23 : vector<32x256xf32>
    %25 = arith.truncf %24 : vector<32x256xf32> to vector<32x256xbf16>
    %c0_12 = arith.constant 0 : index
    %c0_13 = arith.constant 0 : index
    %26 = vector.load %arg6[%c0_12, %c0_13] : memref<16x32xbf16, #tpu.memory_space<vmem>>, vector<16x32xbf16>
    %c0_14 = arith.constant 0 : index
    %c0_15 = arith.constant 0 : index
    %27 = vector.load %arg7[%c0_14, %c0_15] : memref<16x1xf32, #tpu.memory_space<vmem>>, vector<16x1xf32>
    %cst_16 = arith.constant dense<0.000000e+00> : vector<16x256xf32>
    %28 = tpu.matmul %26, %25, %cst_16 {dimension_numbers = #tpu.dot_dimension_numbers<[1], [0], [0], [1], [0, 0, 1, 1], [], []>} : vector<16x32xbf16>, vector<32x256xbf16>, vector<16x256xf32> -> vector<16x256xf32>
    %29 = vector.broadcast %27 : vector<16x1xf32> to vector<16x256xf32>
    %30 = arith.addf %28, %29 : vector<16x256xf32>
    %c0_17 = arith.constant 0 : index
    %c0_18 = arith.constant 0 : index
    %31 = vector.load %arg8[%c0_17, %c0_18] : memref<16x256xf32, #tpu.memory_space<vmem>>, vector<16x256xf32>
    tpu.vector_store %arg8[%c0_17, %c0_18], %30 {strides = array<i32>} : memref<16x256xf32, #tpu.memory_space<vmem>>, vector<16x256xf32>,
    return
  }
  func.func @transform_0(%arg0: i32) -> (i32, i32) {
    %c0_i32 = arith.constant 0 : i32
    %c0_i32_0 = arith.constant 0 : i32
    return %arg0, %c0_i32 : i32, i32
  }
  func.func @transform_1(%arg0: i32) -> (i32, i32) {
    %c0_i32 = arith.constant 0 : i32
    %c0_i32_0 = arith.constant 0 : i32
    %c0_i32_1 = arith.constant 0 : i32
    return %c0_i32, %c0_i32_0 : i32, i32
  }
  func.func @transform_2(%arg0: i32) -> (i32, i32) {
    %c0_i32 = arith.constant 0 : i32
    %c0_i32_0 = arith.constant 0 : i32
    %c0_i32_1 = arith.constant 0 : i32
    return %c0_i32, %c0_i32_0 : i32, i32
  }
  func.func @transform_3(%arg0: i32) -> (i32, i32) {
    %c0_i32 = arith.constant 0 : i32
    %c0_i32_0 = arith.constant 0 : i32
    %c0_i32_1 = arith.constant 0 : i32
    return %c0_i32, %c0_i32_0 : i32, i32
  }
  func.func @transform_4(%arg0: i32) -> (i32, i32) {
    %c0_i32 = arith.constant 0 : i32
    %c0_i32_0 = arith.constant 0 : i32
    %c0_i32_1 = arith.constant 0 : i32
    return %c0_i32, %c0_i32_0 : i32, i32
  }
  func.func @transform_5(%arg0: i32) -> (i32, i32) {
    %c0_i32 = arith.constant 0 : i32
    %c0_i32_0 = arith.constant 0 : i32
    %c0_i32_1 = arith.constant 0 : i32
    return %c0_i32, %c0_i32_0 : i32, i32
  }
  func.func @transform_6(%arg0: i32) -> (i32, i32) {
    %c0_i32 = arith.constant 0 : i32
    %c0_i32_0 = arith.constant 0 : i32
    %c0_i32_1 = arith.constant 0 : i32
    return %c0_i32, %c0_i32_0 : i32, i32
  }
  func.func @transform_7(%arg0: i32) -> (i32, i32) {
    %c0_i32 = arith.constant 0 : i32
    %c0_i32_0 = arith.constant 0 : i32
    return %c0_i32, %arg0 : i32, i32
  }
}

</mosaic_0001>

<llo_original>
// kernel: tpu_custom_call.1
$region0: #{tpu_custom_call.1}
  #allocation0 [shape = 'u32[]', space=smem, size = 0x4, offset = 0x4, fixed_abs, tag = 'smem constant byte address 0x4 - core index']
  #allocation1 [shape = 'u32[72,128]{1,0:T(1,128)}', space=vmem, size = 0x9000, scoped, tag = 'internal scratch']
  %s0 = inlined_call_operand.vmem [shape: f32[512,32], index: 0, kind: input, shape index: {}]
  %s1 = inlined_call_operand.vmem [shape: bf16[64,32], index: 1, kind: input, shape index: {}]
  %s2 = inlined_call_operand.vmem [shape: f32[64,1], index: 2, kind: input, shape index: {}]
  %s3 = inlined_call_operand.vmem [shape: bf16[32,64], index: 3, kind: input, shape index: {}]
  %s4 = inlined_call_operand.vmem [shape: f32[32,1], index: 4, kind: input, shape index: {}]
  %s5 = inlined_call_operand.vmem [shape: bf16[16,32], index: 5, kind: input, shape index: {}]
  %s6 = inlined_call_operand.vmem [shape: f32[16,1], index: 6, kind: input, shape index: {}]
  %s7 = inlined_call_operand.hbm [shape: f32[16,512], index: 7, kind: output, shape index: {}]
  %s8 = sld [smem:[#allocation0]]
  $region61: #{tpu_custom_call.1} parent=0
    _
  %s10 = ssub.s32 1, %s8
  %s11 = scalar_select 0, %s10, %s8
  $region1: #{tpu_custom_call.1} parent=0
    #allocation2 [shape = 'u8[32768]{0}', space=vmem, size = 0x8000, scoped, tag = 'output window, operand 0']
    #allocation3 [shape = 's32[2]{0}', space=sflag, size = 0x8, scoped, tag = 'scoped memory for tpu_custom_call.1']
    %12 = vsyncpa [#allocation3], 0
    %s13 = scalar_lea.sflag [#allocation3], 1
    %14 = vsyncpa %s13, 0
    loop: start=0, step=1, limit=4
    $region2: #{tpu_custom_call.1} parent=1 // loop_pre_header
      _
    $region3: #{tpu_custom_call.1} parent=1 // loop_header
      %s16 = sphi 0, %s20
      %p17 = scmp.ge.s32.totalorder %s16, 4
      %s26 = sphi 0, %s28
      %s29 = sphi 0, %s26
      %s30 = sphi 0, %s29
      %s46 = sphi 0, %s30
      %s50 = sphi 0, %s50
      %s52 = sphi 0, %s50
      %s53 = sphi 0, %s52
      %s67 = sphi 0, %s53
      %s71 = sphi 0, %s71
      %s73 = sphi 0, %s71
      %s74 = sphi 0, %s73
      %s88 = sphi 0, %s74
      %s92 = sphi 0, %s92
      %s94 = sphi 0, %s92
      %s95 = sphi 0, %s94
      %s109 = sphi 0, %s95
      %s113 = sphi 0, %s113
      %s115 = sphi 0, %s113
      %s116 = sphi 0, %s115
      %s130 = sphi 0, %s116
      %s134 = sphi 0, %s134
      %s136 = sphi 0, %s134
      %s137 = sphi 0, %s136
      %s151 = sphi 0, %s137
      %s155 = sphi 0, %s155
      %s157 = sphi 0, %s155
      %s158 = sphi 0, %s157
      %s172 = sphi 0, %s158
      %s178 = sphi 0, %s180
      %s181 = sphi 0, %s178
      %s182 = sphi 0, %s181
      %s198 = sphi 0, %s182
    $region4: #{tpu_custom_call.1} parent=1 // loop_header_branch
      %19 = sbr.rel (%p17) target = $region8
    $region5: #{tpu_custom_call.1} parent=1 // loop_body
      %s21 = ssub.s32 %s16, 1
      %s22 = ssub.s32 %s16, 2
      %s23 = sadd.s32 %s16, 1
      %s24 = ssub.s32 %s16, %s23
      %p25 = scmp.eq.s32.totalorder %s24, 0
      %s27 = sadd.s32 %s26, 1
      %s28 = scalar_select %p25, %s26, %s27
      %p31 = pneg %p25
      %p32 = scmp.eq.s32.totalorder %s16, 1
      %p33 = por %p31, %p32
      %p34 = scmp.ne.s32.totalorder %s26, %s29
      %p35 = scmp.eq.s32.totalorder %s16, 0
      %p36 = por %p34, %p35
      %p37 = scmp.ne.s32.totalorder %s26, %s29
      %p38 = scmp.eq.s32.totalorder %s21, 1
      %p39 = por %p37, %p38
      %p40 = scmp.ne.s32.totalorder %s29, %s30
      %p41 = scmp.eq.s32.totalorder %s21, 0
      %p42 = por %p40, %p41
      %p43 = scmp.ne.s32.totalorder %s29, %s30
      %p44 = scmp.eq.s32.totalorder %s22, 1
      %p45 = por %p43, %p44
      %p47 = scmp.ne.s32.totalorder %s30, %s46
      %p48 = scmp.eq.s32.totalorder %s22, 0
      %p49 = por %p47, %p48
      %s51 = sadd.s32 %s50, 1
      %p54 = scmp.eq.s32.totalorder %s16, 1
      %p55 = scmp.ne.s32.totalorder %s50, %s52
      %p56 = scmp.eq.s32.totalorder %s16, 0
      %p57 = por %p55, %p56
      %p58 = scmp.ne.s32.totalorder %s50, %s52
      %p59 = scmp.eq.s32.totalorder %s21, 1
      %p60 = por %p58, %p59
      %p61 = scmp.ne.s32.totalorder %s52, %s53
      %p62 = scmp.eq.s32.totalorder %s21, 0
      %p63 = por %p61, %p62
      %p64 = scmp.ne.s32.totalorder %s52, %s53
      %p65 = scmp.eq.s32.totalorder %s22, 1
      %p66 = por %p64, %p65
      %p68 = scmp.ne.s32.totalorder %s53, %s67
      %p69 = scmp.eq.s32.totalorder %s22, 0
      %p70 = por %p68, %p69
      %s72 = sadd.s32 %s71, 1
      %p75 = scmp.eq.s32.totalorder %s16, 1
      %p76 = scmp.ne.s32.totalorder %s71, %s73
      %p77 = scmp.eq.s32.totalorder %s16, 0
      %p78 = por %p76, %p77
      %p79 = scmp.ne.s32.totalorder %s71, %s73
      %p80 = scmp.eq.s32.totalorder %s21, 1
      %p81 = por %p79, %p80
      %p82 = scmp.ne.s32.totalorder %s73, %s74
      %p83 = scmp.eq.s32.totalorder %s21, 0
      %p84 = por %p82, %p83
      %p85 = scmp.ne.s32.totalorder %s73, %s74
      %p86 = scmp.eq.s32.totalorder %s22, 1
      %p87 = por %p85, %p86
      %p89 = scmp.ne.s32.totalorder %s74, %s88
      %p90 = scmp.eq.s32.totalorder %s22, 0
      %p91 = por %p89, %p90
      %s93 = sadd.s32 %s92, 1
      %p96 = scmp.eq.s32.totalorder %s16, 1
      %p97 = scmp.ne.s32.totalorder %s92, %s94
      %p98 = scmp.eq.s32.totalorder %s16, 0
      %p99 = por %p97, %p98
      %p100 = scmp.ne.s32.totalorder %s92, %s94
      %p101 = scmp.eq.s32.totalorder %s21, 1
      %p102 = por %p100, %p101
      %p103 = scmp.ne.s32.totalorder %s94, %s95
      %p104 = scmp.eq.s32.totalorder %s21, 0
      %p105 = por %p103, %p104
      %p106 = scmp.ne.s32.totalorder %s94, %s95
      %p107 = scmp.eq.s32.totalorder %s22, 1
      %p108 = por %p106, %p107
      %p110 = scmp.ne.s32.totalorder %s95, %s109
      %p111 = scmp.eq.s32.totalorder %s22, 0
      %p112 = por %p110, %p111
      %s114 = sadd.s32 %s113, 1
      %p117 = scmp.eq.s32.totalorder %s16, 1
      %p118 = scmp.ne.s32.totalorder %s113, %s115
      %p119 = scmp.eq.s32.totalorder %s16, 0
      %p120 = por %p118, %p119
      %p121 = scmp.ne.s32.totalorder %s113, %s115
      %p122 = scmp.eq.s32.totalorder %s21, 1
      %p123 = por %p121, %p122
      %p124 = scmp.ne.s32.totalorder %s115, %s116
      %p125 = scmp.eq.s32.totalorder %s21, 0
      %p126 = por %p124, %p125
      %p127 = scmp.ne.s32.totalorder %s115, %s116
      %p128 = scmp.eq.s32.totalorder %s22, 1
      %p129 = por %p127, %p128
      %p131 = scmp.ne.s32.totalorder %s116, %s130
      %p132 = scmp.eq.s32.totalorder %s22, 0
      %p133 = por %p131, %p132
      %s135 = sadd.s32 %s134, 1
      %p138 = scmp.eq.s32.totalorder %s16, 1
      %p139 = scmp.ne.s32.totalorder %s134, %s136
      %p140 = scmp.eq.s32.totalorder %s16, 0
      %p141 = por %p139, %p140
      %p142 = scmp.ne.s32.totalorder %s134, %s136
      %p143 = scmp.eq.s32.totalorder %s21, 1
      %p144 = por %p142, %p143
      %p145 = scmp.ne.s32.totalorder %s136, %s137
      %p146 = scmp.eq.s32.totalorder %s21, 0
      %p147 = por %p145, %p146
      %p148 = scmp.ne.s32.totalorder %s136, %s137
      %p149 = scmp.eq.s32.totalorder %s22, 1
      %p150 = por %p148, %p149
      %p152 = scmp.ne.s32.totalorder %s137, %s151
      %p153 = scmp.eq.s32.totalorder %s22, 0
      %p154 = por %p152, %p153
      %s156 = sadd.s32 %s155, 1
      %p159 = scmp.eq.s32.totalorder %s16, 1
      %p160 = scmp.ne.s32.totalorder %s155, %s157
      %p161 = scmp.eq.s32.totalorder %s16, 0
      %p162 = por %p160, %p161
      %p163 = scmp.ne.s32.totalorder %s155, %s157
      %p164 = scmp.eq.s32.totalorder %s21, 1
      %p165 = por %p163, %p164
      %p166 = scmp.ne.s32.totalorder %s157, %s158
      %p167 = scmp.eq.s32.totalorder %s21, 0
      %p168 = por %p166, %p167
      %p169 = scmp.ne.s32.totalorder %s157, %s158
      %p170 = scmp.eq.s32.totalorder %s22, 1
      %p171 = por %p169, %p170
      %p173 = scmp.ne.s32.totalorder %s158, %s172
      %p174 = scmp.eq.s32.totalorder %s22, 0
      %p175 = por %p173, %p174
      %s176 = ssub.s32 %s16, %s23
      %p177 = scmp.eq.s32.totalorder %s176, 0
      %s179 = sadd.s32 %s178, 1
      %s180 = scalar_select %p177, %s178, %s179
      %p183 = pneg %p177
      %p184 = scmp.eq.s32.totalorder %s16, 1
      %p185 = por %p183, %p184
      %p186 = scmp.ne.s32.totalorder %s178, %s181
      %p187 = scmp.eq.s32.totalorder %s16, 0
      %p188 = por %p186, %p187
      %p189 = scmp.ne.s32.totalorder %s178, %s181
      %p190 = scmp.eq.s32.totalorder %s21, 1
      %p191 = por %p189, %p190
      %p192 = scmp.ne.s32.totalorder %s181, %s182
      %p193 = scmp.eq.s32.totalorder %s21, 0
      %p194 = por %p192, %p193
      %p195 = scmp.ne.s32.totalorder %s181, %s182
      %p196 = scmp.eq.s32.totalorder %s22, 1
      %p197 = por %p195, %p196
      %p199 = scmp.ne.s32.totalorder %s182, %s198
      %p200 = scmp.eq.s32.totalorder %s22, 0
      %p201 = por %p199, %p200
      %p202 = scmp.le.s32.totalorder 1, %s16
      %p203 = scmp.lt.s32.totalorder %s16, 3
      %p204 = pnand %p202, %p203
      %p205 = pneg %p204
      // Predicated region
      $region9: #{tpu_custom_call.1} parent=5 // pred_check
        _
      $region10: #{tpu_custom_call.1} parent=5 // pred_check_branch
        %207 = sbr.rel (%p204) target = $region12
      $region11: #{tpu_custom_call.1} parent=5 // pred_region
        %s208 = ssub.s32 %s16, 1
        // Predicated region
        $region13: #{tpu_custom_call.1} parent=11 // pred_check
          %p209 = pneg %p63
        $region14: #{tpu_custom_call.1} parent=11 // pred_check_branch
          %211 = sbr.rel (%p209) target = $region16
        $region15: #{tpu_custom_call.1} parent=11 // pred_region
          _
        $region16: #{tpu_custom_call.1} parent=11 // pred_fallthru
          _
        // Predicated region
        $region17: #{tpu_custom_call.1} parent=11 // pred_check
          %p212 = pneg %p84
        $region18: #{tpu_custom_call.1} parent=11 // pred_check_branch
          %214 = sbr.rel (%p212) target = $region20
        $region19: #{tpu_custom_call.1} parent=11 // pred_region
          _
        $region20: #{tpu_custom_call.1} parent=11 // pred_fallthru
          _
        // Predicated region
        $region21: #{tpu_custom_call.1} parent=11 // pred_check
          %p215 = pneg %p105
        $region22: #{tpu_custom_call.1} parent=11 // pred_check_branch
          %217 = sbr.rel (%p215) target = $region24
        $region23: #{tpu_custom_call.1} parent=11 // pred_region
          _
        $region24: #{tpu_custom_call.1} parent=11 // pred_fallthru
          _
        // Predicated region
        $region25: #{tpu_custom_call.1} parent=11 // pred_check
          %p218 = pneg %p126
        $region26: #{tpu_custom_call.1} parent=11 // pred_check_branch
          %220 = sbr.rel (%p218) target = $region28
        $region27: #{tpu_custom_call.1} parent=11 // pred_region
          _
        $region28: #{tpu_custom_call.1} parent=11 // pred_fallthru
          _
        // Predicated region
        $region29: #{tpu_custom_call.1} parent=11 // pred_check
          %p221 = pneg %p147
        $region30: #{tpu_custom_call.1} parent=11 // pred_check_branch
          %223 = sbr.rel (%p221) target = $region32
        $region31: #{tpu_custom_call.1} parent=11 // pred_region
          _
        $region32: #{tpu_custom_call.1} parent=11 // pred_fallthru
          _
        // Predicated region
        $region33: #{tpu_custom_call.1} parent=11 // pred_check
          %p224 = pneg %p168
        $region34: #{tpu_custom_call.1} parent=11 // pred_check_branch
          %226 = sbr.rel (%p224) target = $region36
        $region35: #{tpu_custom_call.1} parent=11 // pred_region
          _
        $region36: #{tpu_custom_call.1} parent=11 // pred_fallthru
          _
      $region12: #{tpu_custom_call.1} parent=5 // pred_fallthru
        _
      %p227 = scmp.lt.s32.totalorder %s16, 2
      // Predicated region
      $region37: #{tpu_custom_call.1} parent=5 // pred_check
        %p228 = pneg %p227
      $region38: #{tpu_custom_call.1} parent=5 // pred_check_branch
        %230 = sbr.rel (%p228) target = $region40
      $region39: #{tpu_custom_call.1} parent=5 // pred_region
        // Predicated region
        $region41: #{tpu_custom_call.1} parent=39 // pred_check
          %p231 = pneg %p36
        $region42: #{tpu_custom_call.1} parent=39 // pred_check_branch
          %233 = sbr.rel (%p231) target = $region44
        $region43: #{tpu_custom_call.1} parent=39 // pred_region
          %s234 = smul.u32 32, %s16
          %p235 = scmp.lt.s32.totalorder %s234, 63
          %s236 = scalar_select %p235, %s234, 63
          %s237 = smul.addr %s236, 8
          %s238 = scalar_lea.vmem %s0, %s237
          %s239 = smul.u32 32, %s16
        $region44: #{tpu_custom_call.1} parent=39 // pred_fallthru
          _
      $region40: #{tpu_custom_call.1} parent=5 // pred_fallthru
        _
      %p240 = scmp.le.s32.totalorder 1, %s16
      %p241 = scmp.lt.s32.totalorder %s16, 3
      %p242 = pnand %p240, %p241
      %p243 = pneg %p242
      // Predicated region
      $region45: #{tpu_custom_call.1} parent=5 // pred_check
        _
      $region46: #{tpu_custom_call.1} parent=5 // pred_check_branch
        %245 = sbr.rel (%p242) target = $region48
      $region47: #{tpu_custom_call.1} parent=5 // pred_region
        %s246 = ssub.s32 %s16, 1
        %s247 = smul.u32 32, %s21
        %p248 = scmp.lt.s32.totalorder %s247, 63
        %s249 = scalar_select %p248, %s247, 63
        %s250 = smul.addr %s249, 8
        %s251 = scalar_lea.vmem %s0, %s250
        %p252 = pneg %p42
        %p253 = pneg %p39
        %p254 = pneg %p63
        %p255 = pneg %p60
        %p256 = pneg %p84
        %p257 = pneg %p81
        %p258 = pneg %p105
        %p259 = pneg %p102
        %p260 = pneg %p126
        %p261 = pneg %p123
        %p262 = pneg %p147
        %p263 = pneg %p144
        %p264 = pneg %p168
        %p265 = pneg %p165
        %p266 = pneg %p194
        %p267 = pneg %p191
        %s268 = sand.u32 %s181, 1
        %s269 = scalar_lea.sflag [#allocation3], %s268
        %s270 = sand.u32 %s181, 1
        %s271 = smul.addr %s270, 32
        %s272 = scalar_lea.vmem [#allocation2], %s271
        %s273 = smul.u32 32, %s21
        %p274 = scmp.lt.s32.totalorder %s273, 63
        %s275 = scalar_select %p274, %s273, 63
        %s276 = smul.addr %s275, 8
        %s277 = scalar_lea.vmem %s0, %s276
        %s278 = smul.u32 32, %s21
        %s279 = smul.u32 2, %s21
        %v281 = vld [vmem:[%s277] sm:$0xff]
        %v282 = vld [vmem:[%s277 + $0x8] sm:$0xff]
        %v283 = vld [vmem:[%s277 + $0x10] sm:$0xff]
        %v284 = vld [vmem:[%s277 + $0x18] sm:$0xff]
        %v285 = vld [vmem:[%s277 + $0x20] sm:$0xff]
        %v286 = vld [vmem:[%s277 + $0x28] sm:$0xff]
        %v287 = vld [vmem:[%s277 + $0x30] sm:$0xff]
        %v288 = vld [vmem:[%s277 + $0x38] sm:$0xff]
        %v289 = vld [vmem:[%s277 + $0x40] sm:$0xff]
        %v290 = vld [vmem:[%s277 + $0x48] sm:$0xff]
        %v291 = vld [vmem:[%s277 + $0x50] sm:$0xff]
        %v292 = vld [vmem:[%s277 + $0x58] sm:$0xff]
        %v293 = vld [vmem:[%s277 + $0x60] sm:$0xff]
        %v294 = vld [vmem:[%s277 + $0x68] sm:$0xff]
        %v295 = vld [vmem:[%s277 + $0x70] sm:$0xff]
        %v296 = vld [vmem:[%s277 + $0x78] sm:$0xff]
        %v297 = vld [vmem:[%s277 + $0x80] sm:$0xff]
        %v298 = vld [vmem:[%s277 + $0x88] sm:$0xff]
        %v299 = vld [vmem:[%s277 + $0x90] sm:$0xff]
        %v300 = vld [vmem:[%s277 + $0x98] sm:$0xff]
        %v301 = vld [vmem:[%s277 + $0xa0] sm:$0xff]
        %v302 = vld [vmem:[%s277 + $0xa8] sm:$0xff]
        %v303 = vld [vmem:[%s277 + $0xb0] sm:$0xff]
        %v304 = vld [vmem:[%s277 + $0xb8] sm:$0xff]
        %v305 = vld [vmem:[%s277 + $0xc0] sm:$0xff]
        %v306 = vld [vmem:[%s277 + $0xc8] sm:$0xff]
        %v307 = vld [vmem:[%s277 + $0xd0] sm:$0xff]
        %v308 = vld [vmem:[%s277 + $0xd8] sm:$0xff]
        %v309 = vld [vmem:[%s277 + $0xe0] sm:$0xff]
        %v310 = vld [vmem:[%s277 + $0xe8] sm:$0xff]
        %v311 = vld [vmem:[%s277 + $0xf0] sm:$0xff]
        %v312 = vld [vmem:[%s277 + $0xf8] sm:$0xff]
        %v313 = vpack.c.bf16 %v282, %v281
        %v314 = vpack.c.bf16 %v284, %v283
        %v315 = vpack.c.bf16 %v286, %v285
        %v316 = vpack.c.bf16 %v288, %v287
        %v317 = vpack.c.bf16 %v290, %v289
        %v318 = vpack.c.bf16 %v292, %v291
        %v319 = vpack.c.bf16 %v294, %v293
        %v320 = vpack.c.bf16 %v296, %v295
        %v321 = vpack.c.bf16 %v298, %v297
        %v322 = vpack.c.bf16 %v300, %v299
        %v323 = vpack.c.bf16 %v302, %v301
        %v324 = vpack.c.bf16 %v304, %v303
        %v325 = vpack.c.bf16 %v306, %v305
        %v326 = vpack.c.bf16 %v308, %v307
        %v327 = vpack.c.bf16 %v310, %v309
        %v328 = vpack.c.bf16 %v312, %v311
        %v329 = vld [vmem:[%s1] sm:$0xf]
        %v330 = vld [vmem:[%s1 + $0x4] sm:$0xf]
        %v331 = vld [vmem:[%s1 + $0x8] sm:$0xf]
        %v332 = vld [vmem:[%s1 + $0xc] sm:$0xf]
        %v333 = vld [vmem:[%s1 + $0x10] sm:$0xf]
        %v334 = vld [vmem:[%s1 + $0x14] sm:$0xf]
        %v335 = vld [vmem:[%s1 + $0x18] sm:$0xf]
        %v336 = vld [vmem:[%s1 + $0x1c] sm:$0xf]
        %v337 = vld [vmem:[%s2] sm:$0xff]
        %v338 = vld [vmem:[%s2 + $0x8] sm:$0xff]
        %v339 = vld [vmem:[%s2 + $0x10] sm:$0xff]
        %v340 = vld [vmem:[%s2 + $0x18] sm:$0xff]
        %v341 = vld [vmem:[%s2 + $0x20] sm:$0xff]
        %v342 = vld [vmem:[%s2 + $0x28] sm:$0xff]
        %v343 = vld [vmem:[%s2 + $0x30] sm:$0xff]
        %v344 = vld [vmem:[%s2 + $0x38] sm:$0xff]
        %346 = vset.pattern.permute.xlu0 0
        %347 = vperm.xlu0 %346, %v337
        %v348 = vpop.permute.xlu0 %347
        %351 = vset.pattern.permute.xlu0 0
        %352 = vperm.xlu0 %351, %v338
        %v353 = vpop.permute.xlu0 %352
        %356 = vset.pattern.permute.xlu0 0
        %357 = vperm.xlu0 %356, %v339
        %v358 = vpop.permute.xlu0 %357
        %361 = vset.pattern.permute.xlu0 0
        %362 = vperm.xlu0 %361, %v340
        %v363 = vpop.permute.xlu0 %362
        %366 = vset.pattern.permute.xlu0 0
        %367 = vperm.xlu0 %366, %v341
        %v368 = vpop.permute.xlu0 %367
        %371 = vset.pattern.permute.xlu0 0
        %372 = vperm.xlu0 %371, %v342
        %v373 = vpop.permute.xlu0 %372
        %376 = vset.pattern.permute.xlu0 0
        %377 = vperm.xlu0 %376, %v343
        %v378 = vpop.permute.xlu0 %377
        %381 = vset.pattern.permute.xlu0 0
        %382 = vperm.xlu0 %381, %v344
        %v383 = vpop.permute.xlu0 %382
        %v393 = vunpack.c.l.b16 %v329
        %v394 = vunpack.c.l.b16 %v330
        %v395 = vunpack.c.l.b16 %v331
        %v396 = vunpack.c.l.b16 %v332
        %v397 = vunpack.c.l.b16 %v333
        %v398 = vunpack.c.l.b16 %v334
        %v399 = vunpack.c.l.b16 %v335
        %v400 = vunpack.c.l.b16 %v336
        %v401 = vpack.c.b16 %v394, %v393
        %v402 = vpack.c.b16 %v396, %v395
        %v403 = vpack.c.b16 %v398, %v397
        %v404 = vpack.c.b16 %v400, %v399
        %vm405 = vcmask 261120
        %v407 = vsel %vm405, %v401, 0
        %v410 = vsel %vm405, %v402, 0
        %v413 = vsel %vm405, %v403, 0
        %v416 = vsel %vm405, %v404, 0
        %v419 = vsel %vm405, %v313, 0
        %v422 = vsel %vm405, %v314, 0
        %v425 = vsel %vm405, %v315, 0
        %v428 = vsel %vm405, %v316, 0
        %v431 = vsel %vm405, %v317, 0
        %v434 = vsel %vm405, %v318, 0
        %v437 = vsel %vm405, %v319, 0
        %v440 = vsel %vm405, %v320, 0
        %v443 = vsel %vm405, %v321, 0
        %v446 = vsel %vm405, %v322, 0
        %v449 = vsel %vm405, %v323, 0
        %v452 = vsel %vm405, %v324, 0
        %v455 = vsel %vm405, %v325, 0
        %v458 = vsel %vm405, %v326, 0
        %v461 = vsel %vm405, %v327, 0
        %v464 = vsel %vm405, %v328, 0
        %466 = vmatpush.bf16.xpose.msra.mxu0 %v440
        %467 = vmatpush.bf16.xpose.msra.mxu0 %v437
        %468 = vmatpush.bf16.xpose.msra.mxu0 %v434
        %469 = vmatpush.bf16.xpose.msra.mxu0 %v431
        %470 = vmatpush.bf16.xpose.msra.mxu0 %v428
        %471 = vmatpush.bf16.xpose.msra.mxu0 %v425
        %472 = vmatpush.bf16.xpose.msra.mxu0 %v422
        %473 = vmatpush.bf16.xpose.msra.mxu0 %v419
        %474 = vmatmul.bf16.gmra.mxu0 %v407
        %v475 = vpop.f32.mrf.mxu0
        %v476 = vadd.f32 %v348, %v475
        %v477 = vpop.f32.mrf.mxu0
        %v478 = vadd.f32 %v353, %v477
        %479 = vmatmul.bf16.gmra.mxu0 %v410
        %v480 = vpop.f32.mrf.mxu0
        %v481 = vadd.f32 %v358, %v480
        %v482 = vpop.f32.mrf.mxu0
        %v483 = vadd.f32 %v363, %v482
        %484 = vmatmul.bf16.gmra.mxu0 %v413
        %v485 = vpop.f32.mrf.mxu0
        %v486 = vadd.f32 %v368, %v485
        %v487 = vpop.f32.mrf.mxu0
        %v488 = vadd.f32 %v373, %v487
        %489 = vmatmul.bf16.gmra.mxu0 %v416
        %v490 = vpop.f32.mrf.mxu0
        %v491 = vadd.f32 %v378, %v490
        %v492 = vpop.f32.mrf.mxu0
        %v493 = vadd.f32 %v383, %v492
        %494 = vdwg.mxu0
        %495 = vmatpush.bf16.xpose.msra.mxu0 %v464
        %496 = vmatpush.bf16.xpose.msra.mxu0 %v461
        %497 = vmatpush.bf16.xpose.msra.mxu0 %v458
        %498 = vmatpush.bf16.xpose.msra.mxu0 %v455
        %499 = vmatpush.bf16.xpose.msra.mxu0 %v452
        %500 = vmatpush.bf16.xpose.msra.mxu0 %v449
        %501 = vmatpush.bf16.xpose.msra.mxu0 %v446
        %502 = vmatpush.bf16.xpose.msra.mxu0 %v443
        %503 = vmatmul.bf16.gmra.mxu0 %v407
        %v504 = vpop.f32.mrf.mxu0
        %v505 = vadd.f32 %v348, %v504
        %v506 = vpop.f32.mrf.mxu0
        %v507 = vadd.f32 %v353, %v506
        %508 = vmatmul.bf16.gmra.mxu0 %v410
        %v509 = vpop.f32.mrf.mxu0
        %v510 = vadd.f32 %v358, %v509
        %v511 = vpop.f32.mrf.mxu0
        %v512 = vadd.f32 %v363, %v511
        %513 = vmatmul.bf16.gmra.mxu0 %v413
        %v514 = vpop.f32.mrf.mxu0
        %v515 = vadd.f32 %v368, %v514
        %v516 = vpop.f32.mrf.mxu0
        %v517 = vadd.f32 %v373, %v516
        %518 = vmatmul.bf16.gmra.mxu0 %v416
        %v519 = vpop.f32.mrf.mxu0
        %v520 = vadd.f32 %v378, %v519
        %v521 = vpop.f32.mrf.mxu0
        %v522 = vadd.f32 %v383, %v521
        %523 = vdwg.mxu0
        %v524 = vxor.u32 %v476, 2147483648
        %v525 = vxor.u32 %v505, 2147483648
        %v526 = vxor.u32 %v478, 2147483648
        %v527 = vxor.u32 %v507, 2147483648
        %v528 = vxor.u32 %v481, 2147483648
        %v529 = vxor.u32 %v510, 2147483648
        %v530 = vxor.u32 %v483, 2147483648
        %v531 = vxor.u32 %v512, 2147483648
        %v532 = vxor.u32 %v486, 2147483648
        %v533 = vxor.u32 %v515, 2147483648
        %v534 = vxor.u32 %v488, 2147483648
        %v535 = vxor.u32 %v517, 2147483648
        %v536 = vxor.u32 %v491, 2147483648
        %v537 = vxor.u32 %v520, 2147483648
        %v538 = vxor.u32 %v493, 2147483648
        %v539 = vxor.u32 %v522, 2147483648
        %v540 = vmul.f32 %v524, 1.442695
        %v541 = vpow.pop %v540
        %v542 = vmul.f32 %v525, 1.442695
        %v543 = vpow.pop %v542
        %v544 = vmul.f32 %v526, 1.442695
        %v545 = vpow.pop %v544
        %v546 = vmul.f32 %v527, 1.442695
        %v547 = vpow.pop %v546
        %v548 = vmul.f32 %v528, 1.442695
        %v549 = vpow.pop %v548
        %v550 = vmul.f32 %v529, 1.442695
        %v551 = vpow.pop %v550
        %v552 = vmul.f32 %v530, 1.442695
        %v553 = vpow.pop %v552
        %v554 = vmul.f32 %v531, 1.442695
        %v555 = vpow.pop %v554
        %v556 = vmul.f32 %v532, 1.442695
        %v557 = vpow.pop %v556
        %v558 = vmul.f32 %v533, 1.442695
        %v559 = vpow.pop %v558
        %v560 = vmul.f32 %v534, 1.442695
        %v561 = vpow.pop %v560
        %v562 = vmul.f32 %v535, 1.442695
        %v563 = vpow.pop %v562
        %v564 = vmul.f32 %v536, 1.442695
        %v565 = vpow.pop %v564
        %v566 = vmul.f32 %v537, 1.442695
        %v567 = vpow.pop %v566
        %v568 = vmul.f32 %v538, 1.442695
        %v569 = vpow.pop %v568
        %v570 = vmul.f32 %v539, 1.442695
        %v571 = vpow.pop %v570
        %v572 = vadd.f32 %v541, 1.0
        %v573 = vadd.f32 %v543, 1.0
        %v574 = vadd.f32 %v545, 1.0
        %v575 = vadd.f32 %v547, 1.0
        %v576 = vadd.f32 %v549, 1.0
        %v577 = vadd.f32 %v551, 1.0
        %v578 = vadd.f32 %v553, 1.0
        %v579 = vadd.f32 %v555, 1.0
        %v580 = vadd.f32 %v557, 1.0
        %v581 = vadd.f32 %v559, 1.0
        %v582 = vadd.f32 %v561, 1.0
        %v583 = vadd.f32 %v563, 1.0
        %v584 = vadd.f32 %v565, 1.0
        %v585 = vadd.f32 %v567, 1.0
        %v586 = vadd.f32 %v569, 1.0
        %v587 = vadd.f32 %v571, 1.0
        %v588 = vrcp.pop %v572
        %v589 = vmul.f32 %v572, %v588
        %v590 = vsub.f32 1.0, %v589
        %v591 = vmul.f32 %v588, %v590
        %v592 = vadd.f32 %v588, %v591
        %vm593 = vweird.f32 %v572
        %vm594 = vweird.f32 %v588
        %vm595 = vmor %vm593, %vm594
        %v596 = vsel %vm595, %v588, %v592
        %v597 = vand.u32 2147483647, %v572
        %vm598 = vcmp.eq.f32.partialorder %v597, 8.507059e+37
        %v599 = vand.u32 %v572, 2147483648
        %v600 = vor.u32 1.1754944e-38, %v599
        %v601 = vsel %vm598, %v600, %v596
        %v602 = vmul.f32 1.0, %v601
        %v603 = vrcp.pop %v573
        %v604 = vmul.f32 %v573, %v603
        %v605 = vsub.f32 1.0, %v604
        %v606 = vmul.f32 %v603, %v605
        %v607 = vadd.f32 %v603, %v606
        %vm608 = vweird.f32 %v573
        %vm609 = vweird.f32 %v603
        %vm610 = vmor %vm608, %vm609
        %v611 = vsel %vm610, %v603, %v607
        %v612 = vand.u32 2147483647, %v573
        %vm613 = vcmp.eq.f32.partialorder %v612, 8.507059e+37
        %v614 = vand.u32 %v573, 2147483648
        %v615 = vor.u32 1.1754944e-38, %v614
        %v616 = vsel %vm613, %v615, %v611
        %v617 = vmul.f32 1.0, %v616
        %v618 = vrcp.pop %v574
        %v619 = vmul.f32 %v574, %v618
        %v620 = vsub.f32 1.0, %v619
        %v621 = vmul.f32 %v618, %v620
        %v622 = vadd.f32 %v618, %v621
        %vm623 = vweird.f32 %v574
        %vm624 = vweird.f32 %v618
        %vm625 = vmor %vm623, %vm624
        %v626 = vsel %vm625, %v618, %v622
        %v627 = vand.u32 2147483647, %v574
        %vm628 = vcmp.eq.f32.partialorder %v627, 8.507059e+37
        %v629 = vand.u32 %v574, 2147483648
        %v630 = vor.u32 1.1754944e-38, %v629
        %v631 = vsel %vm628, %v630, %v626
        %v632 = vmul.f32 1.0, %v631
        %v633 = vrcp.pop %v575
        %v634 = vmul.f32 %v575, %v633
        %v635 = vsub.f32 1.0, %v634
        %v636 = vmul.f32 %v633, %v635
        %v637 = vadd.f32 %v633, %v636
        %vm638 = vweird.f32 %v575
        %vm639 = vweird.f32 %v633
        %vm640 = vmor %vm638, %vm639
        %v641 = vsel %vm640, %v633, %v637
        %v642 = vand.u32 2147483647, %v575
        %vm643 = vcmp.eq.f32.partialorder %v642, 8.507059e+37
        %v644 = vand.u32 %v575, 2147483648
        %v645 = vor.u32 1.1754944e-38, %v644
        %v646 = vsel %vm643, %v645, %v641
        %v647 = vmul.f32 1.0, %v646
        %v648 = vrcp.pop %v576
        %v649 = vmul.f32 %v576, %v648
        %v650 = vsub.f32 1.0, %v649
        %v651 = vmul.f32 %v648, %v650
        %v652 = vadd.f32 %v648, %v651
        %vm653 = vweird.f32 %v576
        %vm654 = vweird.f32 %v648
        %vm655 = vmor %vm653, %vm654
        %v656 = vsel %vm655, %v648, %v652
        %v657 = vand.u32 2147483647, %v576
        %vm658 = vcmp.eq.f32.partialorder %v657, 8.507059e+37
        %v659 = vand.u32 %v576, 2147483648
        %v660 = vor.u32 1.1754944e-38, %v659
        %v661 = vsel %vm658, %v660, %v656
        %v662 = vmul.f32 1.0, %v661
        %v663 = vrcp.pop %v577
        %v664 = vmul.f32 %v577, %v663
        %v665 = vsub.f32 1.0, %v664
        %v666 = vmul.f32 %v663, %v665
        %v667 = vadd.f32 %v663, %v666
        %vm668 = vweird.f32 %v577
        %vm669 = vweird.f32 %v663
        %vm670 = vmor %vm668, %vm669
        %v671 = vsel %vm670, %v663, %v667
        %v672 = vand.u32 2147483647, %v577
        %vm673 = vcmp.eq.f32.partialorder %v672, 8.507059e+37
        %v674 = vand.u32 %v577, 2147483648
        %v675 = vor.u32 1.1754944e-38, %v674
        %v676 = vsel %vm673, %v675, %v671
        %v677 = vmul.f32 1.0, %v676
        %v678 = vrcp.pop %v578
        %v679 = vmul.f32 %v578, %v678
        %v680 = vsub.f32 1.0, %v679
        %v681 = vmul.f32 %v678, %v680
        %v682 = vadd.f32 %v678, %v681
        %vm683 = vweird.f32 %v578
        %vm684 = vweird.f32 %v678
        %vm685 = vmor %vm683, %vm684
        %v686 = vsel %vm685, %v678, %v682
        %v687 = vand.u32 2147483647, %v578
        %vm688 = vcmp.eq.f32.partialorder %v687, 8.507059e+37
        %v689 = vand.u32 %v578, 2147483648
        %v690 = vor.u32 1.1754944e-38, %v689
        %v691 = vsel %vm688, %v690, %v686
        %v692 = vmul.f32 1.0, %v691
        %v693 = vrcp.pop %v579
        %v694 = vmul.f32 %v579, %v693
        %v695 = vsub.f32 1.0, %v694
        %v696 = vmul.f32 %v693, %v695
        %v697 = vadd.f32 %v693, %v696
        %vm698 = vweird.f32 %v579
        %vm699 = vweird.f32 %v693
        %vm700 = vmor %vm698, %vm699
        %v701 = vsel %vm700, %v693, %v697
        %v702 = vand.u32 2147483647, %v579
        %vm703 = vcmp.eq.f32.partialorder %v702, 8.507059e+37
        %v704 = vand.u32 %v579, 2147483648
        %v705 = vor.u32 1.1754944e-38, %v704
        %v706 = vsel %vm703, %v705, %v701
        %v707 = vmul.f32 1.0, %v706
        %v708 = vrcp.pop %v580
        %v709 = vmul.f32 %v580, %v708
        %v710 = vsub.f32 1.0, %v709
        %v711 = vmul.f32 %v708, %v710
        %v712 = vadd.f32 %v708, %v711
        %vm713 = vweird.f32 %v580
        %vm714 = vweird.f32 %v708
        %vm715 = vmor %vm713, %vm714
        %v716 = vsel %vm715, %v708, %v712
        %v717 = vand.u32 2147483647, %v580
        %vm718 = vcmp.eq.f32.partialorder %v717, 8.507059e+37
        %v719 = vand.u32 %v580, 2147483648
        %v720 = vor.u32 1.1754944e-38, %v719
        %v721 = vsel %vm718, %v720, %v716
        %v722 = vmul.f32 1.0, %v721
        %v723 = vrcp.pop %v581
        %v724 = vmul.f32 %v581, %v723
        %v725 = vsub.f32 1.0, %v724
        %v726 = vmul.f32 %v723, %v725
        %v727 = vadd.f32 %v723, %v726
        %vm728 = vweird.f32 %v581
        %vm729 = vweird.f32 %v723
        %vm730 = vmor %vm728, %vm729
        %v731 = vsel %vm730, %v723, %v727
        %v732 = vand.u32 2147483647, %v581
        %vm733 = vcmp.eq.f32.partialorder %v732, 8.507059e+37
        %v734 = vand.u32 %v581, 2147483648
        %v735 = vor.u32 1.1754944e-38, %v734
        %v736 = vsel %vm733, %v735, %v731
        %v737 = vmul.f32 1.0, %v736
        %v738 = vrcp.pop %v582
        %v739 = vmul.f32 %v582, %v738
        %v740 = vsub.f32 1.0, %v739
        %v741 = vmul.f32 %v738, %v740
        %v742 = vadd.f32 %v738, %v741
        %vm743 = vweird.f32 %v582
        %vm744 = vweird.f32 %v738
        %vm745 = vmor %vm743, %vm744
        %v746 = vsel %vm745, %v738, %v742
        %v747 = vand.u32 2147483647, %v582
        %vm748 = vcmp.eq.f32.partialorder %v747, 8.507059e+37
        %v749 = vand.u32 %v582, 2147483648
        %v750 = vor.u32 1.1754944e-38, %v749
        %v751 = vsel %vm748, %v750, %v746
        %v752 = vmul.f32 1.0, %v751
        %v753 = vrcp.pop %v583
        %v754 = vmul.f32 %v583, %v753
        %v755 = vsub.f32 1.0, %v754
        %v756 = vmul.f32 %v753, %v755
        %v757 = vadd.f32 %v753, %v756
        %vm758 = vweird.f32 %v583
        %vm759 = vweird.f32 %v753
        %vm760 = vmor %vm758, %vm759
        %v761 = vsel %vm760, %v753, %v757
        %v762 = vand.u32 2147483647, %v583
        %vm763 = vcmp.eq.f32.partialorder %v762, 8.507059e+37
        %v764 = vand.u32 %v583, 2147483648
        %v765 = vor.u32 1.1754944e-38, %v764
        %v766 = vsel %vm763, %v765, %v761
        %v767 = vmul.f32 1.0, %v766
        %v768 = vrcp.pop %v584
        %v769 = vmul.f32 %v584, %v768
        %v770 = vsub.f32 1.0, %v769
        %v771 = vmul.f32 %v768, %v770
        %v772 = vadd.f32 %v768, %v771
        %vm773 = vweird.f32 %v584
        %vm774 = vweird.f32 %v768
        %vm775 = vmor %vm773, %vm774
        %v776 = vsel %vm775, %v768, %v772
        %v777 = vand.u32 2147483647, %v584
        %vm778 = vcmp.eq.f32.partialorder %v777, 8.507059e+37
        %v779 = vand.u32 %v584, 2147483648
        %v780 = vor.u32 1.1754944e-38, %v779
        %v781 = vsel %vm778, %v780, %v776
        %v782 = vmul.f32 1.0, %v781
        %v783 = vrcp.pop %v585
        %v784 = vmul.f32 %v585, %v783
        %v785 = vsub.f32 1.0, %v784
        %v786 = vmul.f32 %v783, %v785
        %v787 = vadd.f32 %v783, %v786
        %vm788 = vweird.f32 %v585
        %vm789 = vweird.f32 %v783
        %vm790 = vmor %vm788, %vm789
        %v791 = vsel %vm790, %v783, %v787
        %v792 = vand.u32 2147483647, %v585
        %vm793 = vcmp.eq.f32.partialorder %v792, 8.507059e+37
        %v794 = vand.u32 %v585, 2147483648
        %v795 = vor.u32 1.1754944e-38, %v794
        %v796 = vsel %vm793, %v795, %v791
        %v797 = vmul.f32 1.0, %v796
        %v798 = vrcp.pop %v586
        %v799 = vmul.f32 %v586, %v798
        %v800 = vsub.f32 1.0, %v799
        %v801 = vmul.f32 %v798, %v800
        %v802 = vadd.f32 %v798, %v801
        %vm803 = vweird.f32 %v586
        %vm804 = vweird.f32 %v798
        %vm805 = vmor %vm803, %vm804
        %v806 = vsel %vm805, %v798, %v802
        %v807 = vand.u32 2147483647, %v586
        %vm808 = vcmp.eq.f32.partialorder %v807, 8.507059e+37
        %v809 = vand.u32 %v586, 2147483648
        %v810 = vor.u32 1.1754944e-38, %v809
        %v811 = vsel %vm808, %v810, %v806
        %v812 = vmul.f32 1.0, %v811
        %v813 = vrcp.pop %v587
        %v814 = vmul.f32 %v587, %v813
        %v815 = vsub.f32 1.0, %v814
        %v816 = vmul.f32 %v813, %v815
        %v817 = vadd.f32 %v813, %v816
        %vm818 = vweird.f32 %v587
        %vm819 = vweird.f32 %v813
        %vm820 = vmor %vm818, %vm819
        %v821 = vsel %vm820, %v813, %v817
        %v822 = vand.u32 2147483647, %v587
        %vm823 = vcmp.eq.f32.partialorder %v822, 8.507059e+37
        %v824 = vand.u32 %v587, 2147483648
        %v825 = vor.u32 1.1754944e-38, %v824
        %v826 = vsel %vm823, %v825, %v821
        %v827 = vmul.f32 1.0, %v826
        %v828 = vmul.f32 %v476, %v602
        %v829 = vmul.f32 %v505, %v617
        %v830 = vmul.f32 %v478, %v632
        %v831 = vmul.f32 %v507, %v647
        %v832 = vmul.f32 %v481, %v662
        %v833 = vmul.f32 %v510, %v677
        %v834 = vmul.f32 %v483, %v692
        %v835 = vmul.f32 %v512, %v707
        %v836 = vmul.f32 %v486, %v722
        %v837 = vmul.f32 %v515, %v737
        %v838 = vmul.f32 %v488, %v752
        %v839 = vmul.f32 %v517, %v767
        %v840 = vmul.f32 %v491, %v782
        %v841 = vmul.f32 %v520, %v797
        %v842 = vmul.f32 %v493, %v812
        %v843 = vmul.f32 %v522, %v827
        %v844 = vpack.c.bf16 %v830, %v828
        %v845 = vpack.c.bf16 %v831, %v829
        %v846 = vpack.c.bf16 %v834, %v832
        %v847 = vpack.c.bf16 %v835, %v833
        %v848 = vpack.c.bf16 %v838, %v836
        %v849 = vpack.c.bf16 %v839, %v837
        %v850 = vpack.c.bf16 %v842, %v840
        %v851 = vpack.c.bf16 %v843, %v841
        %v852 = vld [vmem:[%s3] sm:$0xf]
        %v853 = vld [vmem:[%s3 + $0x4] sm:$0xf]
        %v854 = vld [vmem:[%s3 + $0x8] sm:$0xf]
        %v855 = vld [vmem:[%s3 + $0xc] sm:$0xf]
        %v856 = vld [vmem:[%s4] sm:$0xff]
        %v857 = vld [vmem:[%s4 + $0x8] sm:$0xff]
        %v858 = vld [vmem:[%s4 + $0x10] sm:$0xff]
        %v859 = vld [vmem:[%s4 + $0x18] sm:$0xff]
        %861 = vset.pattern.permute.xlu0 0
        %862 = vperm.xlu0 %861, %v856
        %v863 = vpop.permute.xlu0 %862
        %866 = vset.pattern.permute.xlu0 0
        %867 = vperm.xlu0 %866, %v857
        %v868 = vpop.permute.xlu0 %867
        %871 = vset.pattern.permute.xlu0 0
        %872 = vperm.xlu0 %871, %v858
        %v873 = vpop.permute.xlu0 %872
        %876 = vset.pattern.permute.xlu0 0
        %877 = vperm.xlu0 %876, %v859
        %v878 = vpop.permute.xlu0 %877
        %v884 = vunpack.c.l.b16 %v852
        %v885 = vunpack.c.l.b16 %v853
        %v886 = vunpack.c.l.b16 %v854
        %v887 = vunpack.c.l.b16 %v855
        %v888 = vpack.c.b16 %v885, %v884
        %v889 = vpack.c.b16 %v887, %v886
        %vm890 = vcmask 523264
        %v892 = vsel %vm890, %v888, 0
        %v895 = vsel %vm890, %v889, 0
        %897 = vmatpush.bf16.msra.mxu0 0
        %898 = vmatpush.bf16.msra.mxu0 0
        %899 = vmatpush.bf16.msra.mxu0 0
        %900 = vmatpush.bf16.msra.mxu0 0
        %901 = vmatpush.bf16.msra.mxu0 %v850
        %902 = vmatpush.bf16.msra.mxu0 %v848
        %903 = vmatpush.bf16.msra.mxu0 %v846
        %904 = vmatpush.bf16.msra.mxu0 %v844
        %905 = vmatmul.bf16.gmra.mxu0 %v892
        %v906 = vpop.f32.mrf.mxu0
        %v907 = vadd.f32 %v863, %v906
        %v908 = vpop.f32.mrf.mxu0
        %v909 = vadd.f32 %v868, %v908
        %910 = vmatmul.bf16.gmra.mxu0 %v895
        %v911 = vpop.f32.mrf.mxu0
        %v912 = vadd.f32 %v873, %v911
        %v913 = vpop.f32.mrf.mxu0
        %v914 = vadd.f32 %v878, %v913
        %915 = vdwg.mxu0
        %916 = vmatpush.bf16.msra.mxu0 0
        %917 = vmatpush.bf16.msra.mxu0 0
        %918 = vmatpush.bf16.msra.mxu0 0
        %919 = vmatpush.bf16.msra.mxu0 0
        %920 = vmatpush.bf16.msra.mxu0 %v851
        %921 = vmatpush.bf16.msra.mxu0 %v849
        %922 = vmatpush.bf16.msra.mxu0 %v847
        %923 = vmatpush.bf16.msra.mxu0 %v845
        %924 = vmatmul.bf16.gmra.mxu0 %v892
        %v925 = vpop.f32.mrf.mxu0
        %v926 = vadd.f32 %v863, %v925
        %v927 = vpop.f32.mrf.mxu0
        %v928 = vadd.f32 %v868, %v927
        %929 = vmatmul.bf16.gmra.mxu0 %v895
        %v930 = vpop.f32.mrf.mxu0
        %v931 = vadd.f32 %v873, %v930
        %v932 = vpop.f32.mrf.mxu0
        %v933 = vadd.f32 %v878, %v932
        %934 = vdwg.mxu0
        %v935 = vxor.u32 %v907, 2147483648
        %v936 = vxor.u32 %v926, 2147483648
        %v937 = vxor.u32 %v909, 2147483648
        %v938 = vxor.u32 %v928, 2147483648
        %v939 = vxor.u32 %v912, 2147483648
        %v940 = vxor.u32 %v931, 2147483648
        %v941 = vxor.u32 %v914, 2147483648
        %v942 = vxor.u32 %v933, 2147483648
        %v943 = vmul.f32 %v935, 1.442695
        %v944 = vpow.pop %v943
        %v945 = vmul.f32 %v936, 1.442695
        %v946 = vpow.pop %v945
        %v947 = vmul.f32 %v937, 1.442695
        %v948 = vpow.pop %v947
        %v949 = vmul.f32 %v938, 1.442695
        %v950 = vpow.pop %v949
        %v951 = vmul.f32 %v939, 1.442695
        %v952 = vpow.pop %v951
        %v953 = vmul.f32 %v940, 1.442695
        %v954 = vpow.pop %v953
        %v955 = vmul.f32 %v941, 1.442695
        %v956 = vpow.pop %v955
        %v957 = vmul.f32 %v942, 1.442695
        %v958 = vpow.pop %v957
        %v959 = vadd.f32 %v944, 1.0
        %v960 = vadd.f32 %v946, 1.0
        %v961 = vadd.f32 %v948, 1.0
        %v962 = vadd.f32 %v950, 1.0
        %v963 = vadd.f32 %v952, 1.0
        %v964 = vadd.f32 %v954, 1.0
        %v965 = vadd.f32 %v956, 1.0
        %v966 = vadd.f32 %v958, 1.0
        %v967 = vrcp.pop %v959
        %v968 = vmul.f32 %v959, %v967
        %v969 = vsub.f32 1.0, %v968
        %v970 = vmul.f32 %v967, %v969
        %v971 = vadd.f32 %v967, %v970
        %vm972 = vweird.f32 %v959
        %vm973 = vweird.f32 %v967
        %vm974 = vmor %vm972, %vm973
        %v975 = vsel %vm974, %v967, %v971
        %v976 = vand.u32 2147483647, %v959
        %vm977 = vcmp.eq.f32.partialorder %v976, 8.507059e+37
        %v978 = vand.u32 %v959, 2147483648
        %v979 = vor.u32 1.1754944e-38, %v978
        %v980 = vsel %vm977, %v979, %v975
        %v981 = vmul.f32 1.0, %v980
        %v982 = vrcp.pop %v960
        %v983 = vmul.f32 %v960, %v982
        %v984 = vsub.f32 1.0, %v983
        %v985 = vmul.f32 %v982, %v984
        %v986 = vadd.f32 %v982, %v985
        %vm987 = vweird.f32 %v960
        %vm988 = vweird.f32 %v982
        %vm989 = vmor %vm987, %vm988
        %v990 = vsel %vm989, %v982, %v986
        %v991 = vand.u32 2147483647, %v960
        %vm992 = vcmp.eq.f32.partialorder %v991, 8.507059e+37
        %v993 = vand.u32 %v960, 2147483648
        %v994 = vor.u32 1.1754944e-38, %v993
        %v995 = vsel %vm992, %v994, %v990
        %v996 = vmul.f32 1.0, %v995
        %v997 = vrcp.pop %v961
        %v998 = vmul.f32 %v961, %v997
        %v999 = vsub.f32 1.0, %v998
        %v1000 = vmul.f32 %v997, %v999
        %v1001 = vadd.f32 %v997, %v1000
        %vm1002 = vweird.f32 %v961
        %vm1003 = vweird.f32 %v997
        %vm1004 = vmor %vm1002, %vm1003
        %v1005 = vsel %vm1004, %v997, %v1001
        %v1006 = vand.u32 2147483647, %v961
        %vm1007 = vcmp.eq.f32.partialorder %v1006, 8.507059e+37
        %v1008 = vand.u32 %v961, 2147483648
        %v1009 = vor.u32 1.1754944e-38, %v1008
        %v1010 = vsel %vm1007, %v1009, %v1005
        %v1011 = vmul.f32 1.0, %v1010
        %v1012 = vrcp.pop %v962
        %v1013 = vmul.f32 %v962, %v1012
        %v1014 = vsub.f32 1.0, %v1013
        %v1015 = vmul.f32 %v1012, %v1014
        %v1016 = vadd.f32 %v1012, %v1015
        %vm1017 = vweird.f32 %v962
        %vm1018 = vweird.f32 %v1012
        %vm1019 = vmor %vm1017, %vm1018
        %v1020 = vsel %vm1019, %v1012, %v1016
        %v1021 = vand.u32 2147483647, %v962
        %vm1022 = vcmp.eq.f32.partialorder %v1021, 8.507059e+37
        %v1023 = vand.u32 %v962, 2147483648
        %v1024 = vor.u32 1.1754944e-38, %v1023
        %v1025 = vsel %vm1022, %v1024, %v1020
        %v1026 = vmul.f32 1.0, %v1025
        %v1027 = vrcp.pop %v963
        %v1028 = vmul.f32 %v963, %v1027
        %v1029 = vsub.f32 1.0, %v1028
        %v1030 = vmul.f32 %v1027, %v1029
        %v1031 = vadd.f32 %v1027, %v1030
        %vm1032 = vweird.f32 %v963
        %vm1033 = vweird.f32 %v1027
        %vm1034 = vmor %vm1032, %vm1033
        %v1035 = vsel %vm1034, %v1027, %v1031
        %v1036 = vand.u32 2147483647, %v963
        %vm1037 = vcmp.eq.f32.partialorder %v1036, 8.507059e+37
        %v1038 = vand.u32 %v963, 2147483648
        %v1039 = vor.u32 1.1754944e-38, %v1038
        %v1040 = vsel %vm1037, %v1039, %v1035
        %v1041 = vmul.f32 1.0, %v1040
        %v1042 = vrcp.pop %v964
        %v1043 = vmul.f32 %v964, %v1042
        %v1044 = vsub.f32 1.0, %v1043
        %v1045 = vmul.f32 %v1042, %v1044
        %v1046 = vadd.f32 %v1042, %v1045
        %vm1047 = vweird.f32 %v964
        %vm1048 = vweird.f32 %v1042
        %vm1049 = vmor %vm1047, %vm1048
        %v1050 = vsel %vm1049, %v1042, %v1046
        %v1051 = vand.u32 2147483647, %v964
        %vm1052 = vcmp.eq.f32.partialorder %v1051, 8.507059e+37
        %v1053 = vand.u32 %v964, 2147483648
        %v1054 = vor.u32 1.1754944e-38, %v1053
        %v1055 = vsel %vm1052, %v1054, %v1050
        %v1056 = vmul.f32 1.0, %v1055
        %v1057 = vrcp.pop %v965
        %v1058 = vmul.f32 %v965, %v1057
        %v1059 = vsub.f32 1.0, %v1058
        %v1060 = vmul.f32 %v1057, %v1059
        %v1061 = vadd.f32 %v1057, %v1060
        %vm1062 = vweird.f32 %v965
        %vm1063 = vweird.f32 %v1057
        %vm1064 = vmor %vm1062, %vm1063
        %v1065 = vsel %vm1064, %v1057, %v1061
        %v1066 = vand.u32 2147483647, %v965
        %vm1067 = vcmp.eq.f32.partialorder %v1066, 8.507059e+37
        %v1068 = vand.u32 %v965, 2147483648
        %v1069 = vor.u32 1.1754944e-38, %v1068
        %v1070 = vsel %vm1067, %v1069, %v1065
        %v1071 = vmul.f32 1.0, %v1070
        %v1072 = vrcp.pop %v966
        %v1073 = vmul.f32 %v966, %v1072
        %v1074 = vsub.f32 1.0, %v1073
        %v1075 = vmul.f32 %v1072, %v1074
        %v1076 = vadd.f32 %v1072, %v1075
        %vm1077 = vweird.f32 %v966
        %vm1078 = vweird.f32 %v1072
        %vm1079 = vmor %vm1077, %vm1078
        %v1080 = vsel %vm1079, %v1072, %v1076
        %v1081 = vand.u32 2147483647, %v966
        %vm1082 = vcmp.eq.f32.partialorder %v1081, 8.507059e+37
        %v1083 = vand.u32 %v966, 2147483648
        %v1084 = vor.u32 1.1754944e-38, %v1083
        %v1085 = vsel %vm1082, %v1084, %v1080
        %v1086 = vmul.f32 1.0, %v1085
        %v1087 = vmul.f32 %v907, %v981
        %v1088 = vmul.f32 %v926, %v996
        %v1089 = vmul.f32 %v909, %v1011
        %v1090 = vmul.f32 %v928, %v1026
        %v1091 = vmul.f32 %v912, %v1041
        %v1092 = vmul.f32 %v931, %v1056
        %v1093 = vmul.f32 %v914, %v1071
        %v1094 = vmul.f32 %v933, %v1086
        %v1095 = vpack.c.bf16 %v1089, %v1087
        %v1096 = vpack.c.bf16 %v1090, %v1088
        %v1097 = vpack.c.bf16 %v1093, %v1091
        %v1098 = vpack.c.bf16 %v1094, %v1092
        %v1099 = vld [vmem:[%s5] sm:$0xf]
        %v1100 = vld [vmem:[%s5 + $0x4] sm:$0xf]
        %v1101 = vld [vmem:[%s6] sm:$0xff]
        %v1102 = vld [vmem:[%s6 + $0x8] sm:$0xff]
        %1104 = vset.pattern.permute.xlu0 0
        %1105 = vperm.xlu0 %1104, %v1101
        %v1106 = vpop.permute.xlu0 %1105
        %1109 = vset.pattern.permute.xlu0 0
        %1110 = vperm.xlu0 %1109, %v1102
        %v1111 = vpop.permute.xlu0 %1110
        %v1115 = vunpack.c.l.b16 %v1099
        %v1116 = vunpack.c.l.b16 %v1100
        %v1117 = vpack.c.b16 %v1116, %v1115
        %v1119 = vsel %vm405, %v1117, 0
        %1121 = vmatpush.bf16.msra.mxu0 0
        %1122 = vmatpush.bf16.msra.mxu0 0
        %1123 = vmatpush.bf16.msra.mxu0 0
        %1124 = vmatpush.bf16.msra.mxu0 0
        %1125 = vmatpush.bf16.msra.mxu0 0
        %1126 = vmatpush.bf16.msra.mxu0 0
        %1127 = vmatpush.bf16.msra.mxu0 %v1097
        %1128 = vmatpush.bf16.msra.mxu0 %v1095
        %1129 = vmatmul.bf16.gmra.mxu0 %v1119
        %v1130 = vpop.f32.mrf.mxu0
        %v1131 = vadd.f32 %v1106, %v1130
        %v1132 = vpop.f32.mrf.mxu0
        %v1133 = vadd.f32 %v1111, %v1132
        %1134 = vdwg.mxu0
        %1135 = vmatpush.bf16.msra.mxu0 0
        %1136 = vmatpush.bf16.msra.mxu0 0
        %1137 = vmatpush.bf16.msra.mxu0 0
        %1138 = vmatpush.bf16.msra.mxu0 0
        %1139 = vmatpush.bf16.msra.mxu0 0
        %1140 = vmatpush.bf16.msra.mxu0 0
        %1141 = vmatpush.bf16.msra.mxu0 %v1098
        %1142 = vmatpush.bf16.msra.mxu0 %v1096
        %1143 = vmatmul.bf16.gmra.mxu0 %v1119
        %v1144 = vpop.f32.mrf.mxu0
        %v1145 = vadd.f32 %v1106, %v1144
        %v1146 = vpop.f32.mrf.mxu0
        %v1147 = vadd.f32 %v1111, %v1146
        %1148 = vdwg.mxu0
        %1149 = vst [vmem:[%s272] sm:$0xff] %v1131
        %1150 = vst [vmem:[%s272 + $0x8] sm:$0xff] %v1145
        %1151 = vst [vmem:[%s272 + $0x10] sm:$0xff] %v1133
        %1152 = vst [vmem:[%s272 + $0x18] sm:$0xff] %v1147
        %s1153 = sand.u32 %s181, 1
        %s1154 = scalar_lea.sflag [#allocation3], %s1153
        %s1155 = sand.u32 %s181, 1
        %s1156 = smul.addr %s1155, 32
        %s1157 = scalar_lea.vmem [#allocation2], %s1156
        // Predicated region
        $region49: #{tpu_custom_call.1} parent=47 // pred_check
          %p1158 = pneg %p191
        $region50: #{tpu_custom_call.1} parent=47 // pred_check_branch
          %1160 = sbr.rel (%p1158) target = $region52
        $region51: #{tpu_custom_call.1} parent=47 // pred_region
          %s1161 = smul.u32 2, %s21
          %1163 = vsyncadd %s1154, 0
          %s1164 = smul.addr %s1161, 8
          %s1165 = scalar_lea.hbm %s7, %s1164
          %s1166 = sshll.u32 %s1157, 4
          %s1167 = int_to_ptr.vmem [resolvable:$true] %s1166
          %s1168 = sshll.u32 %s1165, 4
          %s1169 = int_to_ptr.hbm [resolvable:$true] %s1168
          %1174 = dma.vmem_to_hbm [thread:$0]  %s1167, 512, %s1169, %s1154, 256, 512, 16
        $region52: #{tpu_custom_call.1} parent=47 // pred_fallthru
          _
      $region48: #{tpu_custom_call.1} parent=5 // pred_fallthru
        _
      %p1175 = scmp.le.s32.totalorder 2, %s16
      // Predicated region
      $region53: #{tpu_custom_call.1} parent=5 // pred_check
        %p1176 = pneg %p1175
      $region54: #{tpu_custom_call.1} parent=5 // pred_check_branch
        %1178 = sbr.rel (%p1176) target = $region56
      $region55: #{tpu_custom_call.1} parent=5 // pred_region
        %s1179 = ssub.s32 %s16, 2
        // Predicated region
        $region57: #{tpu_custom_call.1} parent=55 // pred_check
          %p1180 = pneg %p197
        $region58: #{tpu_custom_call.1} parent=55 // pred_check_branch
          %1182 = sbr.rel (%p1180) target = $region60
        $region59: #{tpu_custom_call.1} parent=55 // pred_region
          %s1183 = sand.u32 %s182, 1
          %s1184 = scalar_lea.sflag [#allocation3], %s1183
          %s1185 = sand.u32 %s182, 1
          %s1186 = smul.addr %s1185, 32
          %s1187 = scalar_lea.vmem [#allocation2], %s1186
          %1189 = dma.done %s1184, 512
        $region60: #{tpu_custom_call.1} parent=55 // pred_fallthru
          _
      $region56: #{tpu_custom_call.1} parent=5 // pred_fallthru
        _
    $region6: #{tpu_custom_call.1} parent=1 // loop_footer
      %s20 = sadd.s32 1, %s16
    $region7: #{tpu_custom_call.1} parent=1 // loop_footer_branch
      %15 = sbr.rel target = $region3
    $region8: #{tpu_custom_call.1} parent=1 // loop_exit
      _
    %1190 = vsyncpa [#allocation3], 1
    %s1191 = scalar_lea.sflag [#allocation3], 1
    %1192 = vsyncpa %s1191, 1

// kernel: tpu_custom_call.1
$region0: #{tpu_custom_call.1}
  #allocation0 [shape = 'u32[]', space=smem, size = 0x4, offset = 0x4, fixed_abs, tag = 'smem constant byte address 0x4 - core index']
  #allocation1 [shape = 'u32[72,128]{1,0:T(1,128)}', space=vmem, size = 0x9000, scoped, tag = 'internal scratch']
  %s0 = inlined_call_operand.vmem [shape: f32[512,32], index: 0, kind: input, shape index: {}]
  %s1 = inlined_call_operand.vmem [shape: bf16[64,32], index: 1, kind: input, shape index: {}]
  %s2 = inlined_call_operand.vmem [shape: f32[64,1], index: 2, kind: input, shape index: {}]
  %s3 = inlined_call_operand.vmem [shape: bf16[32,64], index: 3, kind: input, shape index: {}]
  %s4 = inlined_call_operand.vmem [shape: f32[32,1], index: 4, kind: input, shape index: {}]
  %s5 = inlined_call_operand.vmem [shape: bf16[16,32], index: 5, kind: input, shape index: {}]
  %s6 = inlined_call_operand.vmem [shape: f32[16,1], index: 6, kind: input, shape index: {}]
  %s7 = inlined_call_operand.hbm [shape: f32[16,512], index: 7, kind: output, shape index: {}]
  %s8 = sld [smem:[#allocation0]]
  $region61: #{tpu_custom_call.1} parent=0
    _
  %s10 = ssub.s32 1, %s8
  %s11 = scalar_select 0, %s10, %s8
  $region1: #{tpu_custom_call.1} parent=0
    #allocation2 [shape = 'u8[32768]{0}', space=vmem, size = 0x8000, scoped, tag = 'output window, operand 0']
    #allocation3 [shape = 's32[2]{0}', space=sflag, size = 0x8, scoped, tag = 'scoped memory for tpu_custom_call.1']
    %12 = vsyncpa [#allocation3], 0
    %s13 = scalar_lea.sflag [#allocation3], 1
    %14 = vsyncpa %s13, 0
    loop: start=0, step=1, limit=4
    $region2: #{tpu_custom_call.1} parent=1 // loop_pre_header
      _
    $region3: #{tpu_custom_call.1} parent=1 // loop_header
      %s16 = sphi 0, %s20
      %p17 = scmp.ge.s32.totalorder %s16, 4
      %s26 = sphi 0, %s28
      %s29 = sphi 0, %s26
      %s30 = sphi 0, %s29
      %s46 = sphi 0, %s30
      %s50 = sphi 0, %s50
      %s52 = sphi 0, %s50
      %s53 = sphi 0, %s52
      %s67 = sphi 0, %s53
      %s71 = sphi 0, %s71
      %s73 = sphi 0, %s71
      %s74 = sphi 0, %s73
      %s88 = sphi 0, %s74
      %s92 = sphi 0, %s92
      %s94 = sphi 0, %s92
      %s95 = sphi 0, %s94
      %s109 = sphi 0, %s95
      %s113 = sphi 0, %s113
      %s115 = sphi 0, %s113
      %s116 = sphi 0, %s115
      %s130 = sphi 0, %s116
      %s134 = sphi 0, %s134
      %s136 = sphi 0, %s134
      %s137 = sphi 0, %s136
      %s151 = sphi 0, %s137
      %s155 = sphi 0, %s155
      %s157 = sphi 0, %s155
      %s158 = sphi 0, %s157
      %s172 = sphi 0, %s158
      %s178 = sphi 0, %s180
      %s181 = sphi 0, %s178
      %s182 = sphi 0, %s181
      %s198 = sphi 0, %s182
    $region4: #{tpu_custom_call.1} parent=1 // loop_header_branch
      %19 = sbr.rel (%p17) target = $region8
    $region5: #{tpu_custom_call.1} parent=1 // loop_body
      %s21 = ssub.s32 %s16, 1
      %s22 = ssub.s32 %s16, 2
      %s23 = sadd.s32 %s16, 1
      %s24 = ssub.s32 %s16, %s23
      %p25 = scmp.eq.s32.totalorder %s24, 0
      %s27 = sadd.s32 %s26, 1
      %s28 = scalar_select %p25, %s26, %s27
      %p31 = pneg %p25
      %p32 = scmp.eq.s32.totalorder %s16, 1
      %p33 = por %p31, %p32
      %p34 = scmp.ne.s32.totalorder %s26, %s29
      %p35 = scmp.eq.s32.totalorder %s16, 0
      %p36 = por %p34, %p35
      %p37 = scmp.ne.s32.totalorder %s26, %s29
      %p38 = scmp.eq.s32.totalorder %s21, 1
      %p39 = por %p37, %p38
      %p40 = scmp.ne.s32.totalorder %s29, %s30
      %p41 = scmp.eq.s32.totalorder %s21, 0
      %p42 = por %p40, %p41
      %p43 = scmp.ne.s32.totalorder %s29, %s30
      %p44 = scmp.eq.s32.totalorder %s22, 1
      %p45 = por %p43, %p44
      %p47 = scmp.ne.s32.totalorder %s30, %s46
      %p48 = scmp.eq.s32.totalorder %s22, 0
      %p49 = por %p47, %p48
      %s51 = sadd.s32 %s50, 1
      %p54 = scmp.eq.s32.totalorder %s16, 1
      %p55 = scmp.ne.s32.totalorder %s50, %s52
      %p56 = scmp.eq.s32.totalorder %s16, 0
      %p57 = por %p55, %p56
      %p58 = scmp.ne.s32.totalorder %s50, %s52
      %p59 = scmp.eq.s32.totalorder %s21, 1
      %p60 = por %p58, %p59
      %p61 = scmp.ne.s32.totalorder %s52, %s53
      %p62 = scmp.eq.s32.totalorder %s21, 0
      %p63 = por %p61, %p62
      %p64 = scmp.ne.s32.totalorder %s52, %s53
      %p65 = scmp.eq.s32.totalorder %s22, 1
      %p66 = por %p64, %p65
      %p68 = scmp.ne.s32.totalorder %s53, %s67
      %p69 = scmp.eq.s32.totalorder %s22, 0
      %p70 = por %p68, %p69
      %s72 = sadd.s32 %s71, 1
      %p75 = scmp.eq.s32.totalorder %s16, 1
      %p76 = scmp.ne.s32.totalorder %s71, %s73
      %p77 = scmp.eq.s32.totalorder %s16, 0
      %p78 = por %p76, %p77
      %p79 = scmp.ne.s32.totalorder %s71, %s73
      %p80 = scmp.eq.s32.totalorder %s21, 1
      %p81 = por %p79, %p80
      %p82 = scmp.ne.s32.totalorder %s73, %s74
      %p83 = scmp.eq.s32.totalorder %s21, 0
      %p84 = por %p82, %p83
      %p85 = scmp.ne.s32.totalorder %s73, %s74
      %p86 = scmp.eq.s32.totalorder %s22, 1
      %p87 = por %p85, %p86
      %p89 = scmp.ne.s32.totalorder %s74, %s88
      %p90 = scmp.eq.s32.totalorder %s22, 0
      %p91 = por %p89, %p90
      %s93 = sadd.s32 %s92, 1
      %p96 = scmp.eq.s32.totalorder %s16, 1
      %p97 = scmp.ne.s32.totalorder %s92, %s94
      %p98 = scmp.eq.s32.totalorder %s16, 0
      %p99 = por %p97, %p98
      %p100 = scmp.ne.s32.totalorder %s92, %s94
      %p101 = scmp.eq.s32.totalorder %s21, 1
      %p102 = por %p100, %p101
      %p103 = scmp.ne.s32.totalorder %s94, %s95
      %p104 = scmp.eq.s32.totalorder %s21, 0
      %p105 = por %p103, %p104
      %p106 = scmp.ne.s32.totalorder %s94, %s95
      %p107 = scmp.eq.s32.totalorder %s22, 1
      %p108 = por %p106, %p107
      %p110 = scmp.ne.s32.totalorder %s95, %s109
      %p111 = scmp.eq.s32.totalorder %s22, 0
      %p112 = por %p110, %p111
      %s114 = sadd.s32 %s113, 1
      %p117 = scmp.eq.s32.totalorder %s16, 1
      %p118 = scmp.ne.s32.totalorder %s113, %s115
      %p119 = scmp.eq.s32.totalorder %s16, 0
      %p120 = por %p118, %p119
      %p121 = scmp.ne.s32.totalorder %s113, %s115
      %p122 = scmp.eq.s32.totalorder %s21, 1
      %p123 = por %p121, %p122
      %p124 = scmp.ne.s32.totalorder %s115, %s116
      %p125 = scmp.eq.s32.totalorder %s21, 0
      %p126 = por %p124, %p125
      %p127 = scmp.ne.s32.totalorder %s115, %s116
      %p128 = scmp.eq.s32.totalorder %s22, 1
      %p129 = por %p127, %p128
      %p131 = scmp.ne.s32.totalorder %s116, %s130
      %p132 = scmp.eq.s32.totalorder %s22, 0
      %p133 = por %p131, %p132
      %s135 = sadd.s32 %s134, 1
      %p138 = scmp.eq.s32.totalorder %s16, 1
      %p139 = scmp.ne.s32.totalorder %s134, %s136
      %p140 = scmp.eq.s32.totalorder %s16, 0
      %p141 = por %p139, %p140
      %p142 = scmp.ne.s32.totalorder %s134, %s136
      %p143 = scmp.eq.s32.totalorder %s21, 1
      %p144 = por %p142, %p143
      %p145 = scmp.ne.s32.totalorder %s136, %s137
      %p146 = scmp.eq.s32.totalorder %s21, 0
      %p147 = por %p145, %p146
      %p148 = scmp.ne.s32.totalorder %s136, %s137
      %p149 = scmp.eq.s32.totalorder %s22, 1
      %p150 = por %p148, %p149
      %p152 = scmp.ne.s32.totalorder %s137, %s151
      %p153 = scmp.eq.s32.totalorder %s22, 0
      %p154 = por %p152, %p153
      %s156 = sadd.s32 %s155, 1
      %p159 = scmp.eq.s32.totalorder %s16, 1
      %p160 = scmp.ne.s32.totalorder %s155, %s157
      %p161 = scmp.eq.s32.totalorder %s16, 0
      %p162 = por %p160, %p161
      %p163 = scmp.ne.s32.totalorder %s155, %s157
      %p164 = scmp.eq.s32.totalorder %s21, 1
      %p165 = por %p163, %p164
      %p166 = scmp.ne.s32.totalorder %s157, %s158
      %p167 = scmp.eq.s32.totalorder %s21, 0
      %p168 = por %p166, %p167
      %p169 = scmp.ne.s32.totalorder %s157, %s158
      %p170 = scmp.eq.s32.totalorder %s22, 1
      %p171 = por %p169, %p170
      %p173 = scmp.ne.s32.totalorder %s158, %s172
      %p174 = scmp.eq.s32.totalorder %s22, 0
      %p175 = por %p173, %p174
      %s176 = ssub.s32 %s16, %s23
      %p177 = scmp.eq.s32.totalorder %s176, 0
      %s179 = sadd.s32 %s178, 1
      %s180 = scalar_select %p177, %s178, %s179
      %p183 = pneg %p177
      %p184 = scmp.eq.s32.totalorder %s16, 1
      %p185 = por %p183, %p184
      %p186 = scmp.ne.s32.totalorder %s178, %s181
      %p187 = scmp.eq.s32.totalorder %s16, 0
      %p188 = por %p186, %p187
      %p189 = scmp.ne.s32.totalorder %s178, %s181
      %p190 = scmp.eq.s32.totalorder %s21, 1
      %p191 = por %p189, %p190
      %p192 = scmp.ne.s32.totalorder %s181, %s182
      %p193 = scmp.eq.s32.totalorder %s21, 0
      %p194 = por %p192, %p193
      %p195 = scmp.ne.s32.totalorder %s181, %s182
      %p196 = scmp.eq.s32.totalorder %s22, 1
      %p197 = por %p195, %p196
      %p199 = scmp.ne.s32.totalorder %s182, %s198
      %p200 = scmp.eq.s32.totalorder %s22, 0
      %p201 = por %p199, %p200
      %p202 = scmp.le.s32.totalorder 1, %s16
      %p203 = scmp.lt.s32.totalorder %s16, 3
      %p204 = pnand %p202, %p203
      %p205 = pneg %p204
      // Predicated region
      $region9: #{tpu_custom_call.1} parent=5 // pred_check
        _
      $region10: #{tpu_custom_call.1} parent=5 // pred_check_branch
        %207 = sbr.rel (%p204) target = $region12
      $region11: #{tpu_custom_call.1} parent=5 // pred_region
        %s208 = ssub.s32 %s16, 1
        // Predicated region
        $region13: #{tpu_custom_call.1} parent=11 // pred_check
          %p209 = pneg %p63
        $region14: #{tpu_custom_call.1} parent=11 // pred_check_branch
          %211 = sbr.rel (%p209) target = $region16
        $region15: #{tpu_custom_call.1} parent=11 // pred_region
          _
        $region16: #{tpu_custom_call.1} parent=11 // pred_fallthru
          _
        // Predicated region
        $region17: #{tpu_custom_call.1} parent=11 // pred_check
          %p212 = pneg %p84
        $region18: #{tpu_custom_call.1} parent=11 // pred_check_branch
          %214 = sbr.rel (%p212) target = $region20
        $region19: #{tpu_custom_call.1} parent=11 // pred_region
          _
        $region20: #{tpu_custom_call.1} parent=11 // pred_fallthru
          _
        // Predicated region
        $region21: #{tpu_custom_call.1} parent=11 // pred_check
          %p215 = pneg %p105
        $region22: #{tpu_custom_call.1} parent=11 // pred_check_branch
          %217 = sbr.rel (%p215) target = $region24
        $region23: #{tpu_custom_call.1} parent=11 // pred_region
          _
        $region24: #{tpu_custom_call.1} parent=11 // pred_fallthru
          _
        // Predicated region
        $region25: #{tpu_custom_call.1} parent=11 // pred_check
          %p218 = pneg %p126
        $region26: #{tpu_custom_call.1} parent=11 // pred_check_branch
          %220 = sbr.rel (%p218) target = $region28
        $region27: #{tpu_custom_call.1} parent=11 // pred_region
          _
        $region28: #{tpu_custom_call.1} parent=11 // pred_fallthru
          _
        // Predicated region
        $region29: #{tpu_custom_call.1} parent=11 // pred_check
          %p221 = pneg %p147
        $region30: #{tpu_custom_call.1} parent=11 // pred_check_branch
          %223 = sbr.rel (%p221) target = $region32
        $region31: #{tpu_custom_call.1} parent=11 // pred_region
          _
        $region32: #{tpu_custom_call.1} parent=11 // pred_fallthru
          _
        // Predicated region
        $region33: #{tpu_custom_call.1} parent=11 // pred_check
          %p224 = pneg %p168
        $region34: #{tpu_custom_call.1} parent=11 // pred_check_branch
          %226 = sbr.rel (%p224) target = $region36
        $region35: #{tpu_custom_call.1} parent=11 // pred_region
          _
        $region36: #{tpu_custom_call.1} parent=11 // pred_fallthru
          _
      $region12: #{tpu_custom_call.1} parent=5 // pred_fallthru
        _
      %p227 = scmp.lt.s32.totalorder %s16, 2
      // Predicated region
      $region37: #{tpu_custom_call.1} parent=5 // pred_check
        %p228 = pneg %p227
      $region38: #{tpu_custom_call.1} parent=5 // pred_check_branch
        %230 = sbr.rel (%p228) target = $region40
      $region39: #{tpu_custom_call.1} parent=5 // pred_region
        // Predicated region
        $region41: #{tpu_custom_call.1} parent=39 // pred_check
          %p231 = pneg %p36
        $region42: #{tpu_custom_call.1} parent=39 // pred_check_branch
          %233 = sbr.rel (%p231) target = $region44
        $region43: #{tpu_custom_call.1} parent=39 // pred_region
          %s234 = smul.u32 32, %s16
          %p235 = scmp.lt.s32.totalorder %s234, 63
          %s236 = scalar_select %p235, %s234, 63
          %s237 = smul.addr %s236, 8
          %s238 = scalar_lea.vmem %s0, %s237
          %s239 = smul.u32 32, %s16
        $region44: #{tpu_custom_call.1} parent=39 // pred_fallthru
          _
      $region40: #{tpu_custom_call.1} parent=5 // pred_fallthru
        _
      %p240 = scmp.le.s32.totalorder 1, %s16
      %p241 = scmp.lt.s32.totalorder %s16, 3
      %p242 = pnand %p240, %p241
      %p243 = pneg %p242
      // Predicated region
      $region45: #{tpu_custom_call.1} parent=5 // pred_check
        _
      $region46: #{tpu_custom_call.1} parent=5 // pred_check_branch
        %245 = sbr.rel (%p242) target = $region48
      $region47: #{tpu_custom_call.1} parent=5 // pred_region
        %s246 = ssub.s32 %s16, 1
        %s247 = smul.u32 32, %s21
        %p248 = scmp.lt.s32.totalorder %s247, 63
        %s249 = scalar_select %p248, %s247, 63
        %s250 = smul.addr %s249, 8
        %s251 = scalar_lea.vmem %s0, %s250
        %p252 = pneg %p42
        %p253 = pneg %p39
        %p254 = pneg %p63
        %p255 = pneg %p60
        %p256 = pneg %p84
        %p257 = pneg %p81
        %p258 = pneg %p105
        %p259 = pneg %p102
        %p260 = pneg %p126
        %p261 = pneg %p123
        %p262 = pneg %p147
        %p263 = pneg %p144
        %p264 = pneg %p168
        %p265 = pneg %p165
        %p266 = pneg %p194
        %p267 = pneg %p191
        %s268 = sand.u32 %s181, 1
        %s269 = scalar_lea.sflag [#allocation3], %s268
        %s270 = sand.u32 %s181, 1
        %s271 = smul.addr %s270, 32
        %s272 = scalar_lea.vmem [#allocation2], %s271
        %s273 = smul.u32 32, %s21
        %p274 = scmp.lt.s32.totalorder %s273, 63
        %s275 = scalar_select %p274, %s273, 63
        %s276 = smul.addr %s275, 8
        %s277 = scalar_lea.vmem %s0, %s276
        %s278 = smul.u32 32, %s21
        %s279 = smul.u32 2, %s21
        %v281 = vld [vmem:[%s277] sm:$0xff]
        %v282 = vld [vmem:[%s277 + $0x8] sm:$0xff]
        %v283 = vld [vmem:[%s277 + $0x10] sm:$0xff]
        %v284 = vld [vmem:[%s277 + $0x18] sm:$0xff]
        %v285 = vld [vmem:[%s277 + $0x20] sm:$0xff]
        %v286 = vld [vmem:[%s277 + $0x28] sm:$0xff]
        %v287 = vld [vmem:[%s277 + $0x30] sm:$0xff]
        %v288 = vld [vmem:[%s277 + $0x38] sm:$0xff]
        %v289 = vld [vmem:[%s277 + $0x40] sm:$0xff]
        %v290 = vld [vmem:[%s277 + $0x48] sm:$0xff]
        %v291 = vld [vmem:[%s277 + $0x50] sm:$0xff]
        %v292 = vld [vmem:[%s277 + $0x58] sm:$0xff]
        %v293 = vld [vmem:[%s277 + $0x60] sm:$0xff]
        %v294 = vld [vmem:[%s277 + $0x68] sm:$0xff]
        %v295 = vld [vmem:[%s277 + $0x70] sm:$0xff]
        %v296 = vld [vmem:[%s277 + $0x78] sm:$0xff]
        %v297 = vld [vmem:[%s277 + $0x80] sm:$0xff]
        %v298 = vld [vmem:[%s277 + $0x88] sm:$0xff]
        %v299 = vld [vmem:[%s277 + $0x90] sm:$0xff]
        %v300 = vld [vmem:[%s277 + $0x98] sm:$0xff]
        %v301 = vld [vmem:[%s277 + $0xa0] sm:$0xff]
        %v302 = vld [vmem:[%s277 + $0xa8] sm:$0xff]
        %v303 = vld [vmem:[%s277 + $0xb0] sm:$0xff]
        %v304 = vld [vmem:[%s277 + $0xb8] sm:$0xff]
        %v305 = vld [vmem:[%s277 + $0xc0] sm:$0xff]
        %v306 = vld [vmem:[%s277 + $0xc8] sm:$0xff]
        %v307 = vld [vmem:[%s277 + $0xd0] sm:$0xff]
        %v308 = vld [vmem:[%s277 + $0xd8] sm:$0xff]
        %v309 = vld [vmem:[%s277 + $0xe0] sm:$0xff]
        %v310 = vld [vmem:[%s277 + $0xe8] sm:$0xff]
        %v311 = vld [vmem:[%s277 + $0xf0] sm:$0xff]
        %v312 = vld [vmem:[%s277 + $0xf8] sm:$0xff]
        %v313 = vpack.c.bf16 %v282, %v281
        %v314 = vpack.c.bf16 %v284, %v283
        %v315 = vpack.c.bf16 %v286, %v285
        %v316 = vpack.c.bf16 %v288, %v287
        %v317 = vpack.c.bf16 %v290, %v289
        %v318 = vpack.c.bf16 %v292, %v291
        %v319 = vpack.c.bf16 %v294, %v293
        %v320 = vpack.c.bf16 %v296, %v295
        %v321 = vpack.c.bf16 %v298, %v297
        %v322 = vpack.c.bf16 %v300, %v299
        %v323 = vpack.c.bf16 %v302, %v301
        %v324 = vpack.c.bf16 %v304, %v303
        %v325 = vpack.c.bf16 %v306, %v305
        %v326 = vpack.c.bf16 %v308, %v307
        %v327 = vpack.c.bf16 %v310, %v309
        %v328 = vpack.c.bf16 %v312, %v311
        %v329 = vld [vmem:[%s1] sm:$0xf]
        %v330 = vld [vmem:[%s1 + $0x4] sm:$0xf]
        %v331 = vld [vmem:[%s1 + $0x8] sm:$0xf]
        %v332 = vld [vmem:[%s1 + $0xc] sm:$0xf]
        %v333 = vld [vmem:[%s1 + $0x10] sm:$0xf]
        %v334 = vld [vmem:[%s1 + $0x14] sm:$0xf]
        %v335 = vld [vmem:[%s1 + $0x18] sm:$0xf]
        %v336 = vld [vmem:[%s1 + $0x1c] sm:$0xf]
        %v337 = vld [vmem:[%s2] sm:$0xff]
        %v338 = vld [vmem:[%s2 + $0x8] sm:$0xff]
        %v339 = vld [vmem:[%s2 + $0x10] sm:$0xff]
        %v340 = vld [vmem:[%s2 + $0x18] sm:$0xff]
        %v341 = vld [vmem:[%s2 + $0x20] sm:$0xff]
        %v342 = vld [vmem:[%s2 + $0x28] sm:$0xff]
        %v343 = vld [vmem:[%s2 + $0x30] sm:$0xff]
        %v344 = vld [vmem:[%s2 + $0x38] sm:$0xff]
        %346 = vset.pattern.permute.xlu0 0
        %347 = vperm.xlu0 %346, %v337
        %v348 = vpop.permute.xlu0 %347
        %351 = vset.pattern.permute.xlu0 0
        %352 = vperm.xlu0 %351, %v338
        %v353 = vpop.permute.xlu0 %352
        %356 = vset.pattern.permute.xlu0 0
        %357 = vperm.xlu0 %356, %v339
        %v358 = vpop.permute.xlu0 %357
        %361 = vset.pattern.permute.xlu0 0
        %362 = vperm.xlu0 %361, %v340
        %v363 = vpop.permute.xlu0 %362
        %366 = vset.pattern.permute.xlu0 0
        %367 = vperm.xlu0 %366, %v341
        %v368 = vpop.permute.xlu0 %367
        %371 = vset.pattern.permute.xlu0 0
        %372 = vperm.xlu0 %371, %v342
        %v373 = vpop.permute.xlu0 %372
        %376 = vset.pattern.permute.xlu0 0
        %377 = vperm.xlu0 %376, %v343
        %v378 = vpop.permute.xlu0 %377
        %381 = vset.pattern.permute.xlu0 0
        %382 = vperm.xlu0 %381, %v344
        %v383 = vpop.permute.xlu0 %382
        %v393 = vunpack.c.l.b16 %v329
        %v394 = vunpack.c.l.b16 %v330
        %v395 = vunpack.c.l.b16 %v331
        %v396 = vunpack.c.l.b16 %v332
        %v397 = vunpack.c.l.b16 %v333
        %v398 = vunpack.c.l.b16 %v334
        %v399 = vunpack.c.l.b16 %v335
        %v400 = vunpack.c.l.b16 %v336
        %v401 = vpack.c.b16 %v394, %v393
        %v402 = vpack.c.b16 %v396, %v395
        %v403 = vpack.c.b16 %v398, %v397
        %v404 = vpack.c.b16 %v400, %v399
        %vm405 = vcmask 261120
        %v407 = vsel %vm405, %v401, 0
        %v410 = vsel %vm405, %v402, 0
        %v413 = vsel %vm405, %v403, 0
        %v416 = vsel %vm405, %v404, 0
        %v419 = vsel %vm405, %v313, 0
        %v422 = vsel %vm405, %v314, 0
        %v425 = vsel %vm405, %v315, 0
        %v428 = vsel %vm405, %v316, 0
        %v431 = vsel %vm405, %v317, 0
        %v434 = vsel %vm405, %v318, 0
        %v437 = vsel %vm405, %v319, 0
        %v440 = vsel %vm405, %v320, 0
        %v443 = vsel %vm405, %v321, 0
        %v446 = vsel %vm405, %v322, 0
        %v449 = vsel %vm405, %v323, 0
        %v452 = vsel %vm405, %v324, 0
        %v455 = vsel %vm405, %v325, 0
        %v458 = vsel %vm405, %v326, 0
        %v461 = vsel %vm405, %v327, 0
        %v464 = vsel %vm405, %v328, 0
        %466 = vmatpush.bf16.xpose.msra.mxu0 %v440
        %467 = vmatpush.bf16.xpose.msra.mxu0 %v437
        %468 = vmatpush.bf16.xpose.msra.mxu0 %v434
        %469 = vmatpush.bf16.xpose.msra.mxu0 %v431
        %470 = vmatpush.bf16.xpose.msra.mxu0 %v428
        %471 = vmatpush.bf16.xpose.msra.mxu0 %v425
        %472 = vmatpush.bf16.xpose.msra.mxu0 %v422
        %473 = vmatpush.bf16.xpose.msra.mxu0 %v419
        %474 = vmatmul.bf16.gmra.mxu0 %v407
        %v475 = vpop.f32.mrf.mxu0
        %v476 = vadd.f32 %v348, %v475
        %v477 = vpop.f32.mrf.mxu0
        %v478 = vadd.f32 %v353, %v477
        %479 = vmatmul.bf16.gmra.mxu0 %v410
        %v480 = vpop.f32.mrf.mxu0
        %v481 = vadd.f32 %v358, %v480
        %v482 = vpop.f32.mrf.mxu0
        %v483 = vadd.f32 %v363, %v482
        %484 = vmatmul.bf16.gmra.mxu0 %v413
        %v485 = vpop.f32.mrf.mxu0
        %v486 = vadd.f32 %v368, %v485
        %v487 = vpop.f32.mrf.mxu0
        %v488 = vadd.f32 %v373, %v487
        %489 = vmatmul.bf16.gmra.mxu0 %v416
        %v490 = vpop.f32.mrf.mxu0
        %v491 = vadd.f32 %v378, %v490
        %v492 = vpop.f32.mrf.mxu0
        %v493 = vadd.f32 %v383, %v492
        %494 = vdwg.mxu0
        %495 = vmatpush.bf16.xpose.msra.mxu0 %v464
        %496 = vmatpush.bf16.xpose.msra.mxu0 %v461
        %497 = vmatpush.bf16.xpose.msra.mxu0 %v458
        %498 = vmatpush.bf16.xpose.msra.mxu0 %v455
        %499 = vmatpush.bf16.xpose.msra.mxu0 %v452
        %500 = vmatpush.bf16.xpose.msra.mxu0 %v449
        %501 = vmatpush.bf16.xpose.msra.mxu0 %v446
        %502 = vmatpush.bf16.xpose.msra.mxu0 %v443
        %503 = vmatmul.bf16.gmra.mxu0 %v407
        %v504 = vpop.f32.mrf.mxu0
        %v505 = vadd.f32 %v348, %v504
        %v506 = vpop.f32.mrf.mxu0
        %v507 = vadd.f32 %v353, %v506
        %508 = vmatmul.bf16.gmra.mxu0 %v410
        %v509 = vpop.f32.mrf.mxu0
        %v510 = vadd.f32 %v358, %v509
        %v511 = vpop.f32.mrf.mxu0
        %v512 = vadd.f32 %v363, %v511
        %513 = vmatmul.bf16.gmra.mxu0 %v413
        %v514 = vpop.f32.mrf.mxu0
        %v515 = vadd.f32 %v368, %v514
        %v516 = vpop.f32.mrf.mxu0
        %v517 = vadd.f32 %v373, %v516
        %518 = vmatmul.bf16.gmra.mxu0 %v416
        %v519 = vpop.f32.mrf.mxu0
        %v520 = vadd.f32 %v378, %v519
        %v521 = vpop.f32.mrf.mxu0
        %v522 = vadd.f32 %v383, %v521
        %523 = vdwg.mxu0
        %v524 = vxor.u32 %v476, 2147483648
        %v525 = vxor.u32 %v505, 2147483648
        %v526 = vxor.u32 %v478, 2147483648
        %v527 = vxor.u32 %v507, 2147483648
        %v528 = vxor.u32 %v481, 2147483648
        %v529 = vxor.u32 %v510, 2147483648
        %v530 = vxor.u32 %v483, 2147483648
        %v531 = vxor.u32 %v512, 2147483648
        %v532 = vxor.u32 %v486, 2147483648
        %v533 = vxor.u32 %v515, 2147483648
        %v534 = vxor.u32 %v488, 2147483648
        %v535 = vxor.u32 %v517, 2147483648
        %v536 = vxor.u32 %v491, 2147483648
        %v537 = vxor.u32 %v520, 2147483648
        %v538 = vxor.u32 %v493, 2147483648
        %v539 = vxor.u32 %v522, 2147483648
        %v540 = vmul.f32 %v524, 1.442695
        %v541 = vpow.pop %v540
        %v542 = vmul.f32 %v525, 1.442695
        %v543 = vpow.pop %v542
        %v544 = vmul.f32 %v526, 1.442695
        %v545 = vpow.pop %v544
        %v546 = vmul.f32 %v527, 1.442695
        %v547 = vpow.pop %v546
        %v548 = vmul.f32 %v528, 1.442695
        %v549 = vpow.pop %v548
        %v550 = vmul.f32 %v529, 1.442695
        %v551 = vpow.pop %v550
        %v552 = vmul.f32 %v530, 1.442695
        %v553 = vpow.pop %v552
        %v554 = vmul.f32 %v531, 1.442695
        %v555 = vpow.pop %v554
        %v556 = vmul.f32 %v532, 1.442695
        %v557 = vpow.pop %v556
        %v558 = vmul.f32 %v533, 1.442695
        %v559 = vpow.pop %v558
        %v560 = vmul.f32 %v534, 1.442695
        %v561 = vpow.pop %v560
        %v562 = vmul.f32 %v535, 1.442695
        %v563 = vpow.pop %v562
        %v564 = vmul.f32 %v536, 1.442695
        %v565 = vpow.pop %v564
        %v566 = vmul.f32 %v537, 1.442695
        %v567 = vpow.pop %v566
        %v568 = vmul.f32 %v538, 1.442695
        %v569 = vpow.pop %v568
        %v570 = vmul.f32 %v539, 1.442695
        %v571 = vpow.pop %v570
        %v572 = vadd.f32 %v541, 1.0
        %v573 = vadd.f32 %v543, 1.0
        %v574 = vadd.f32 %v545, 1.0
        %v575 = vadd.f32 %v547, 1.0
        %v576 = vadd.f32 %v549, 1.0
        %v577 = vadd.f32 %v551, 1.0
        %v578 = vadd.f32 %v553, 1.0
        %v579 = vadd.f32 %v555, 1.0
        %v580 = vadd.f32 %v557, 1.0
        %v581 = vadd.f32 %v559, 1.0
        %v582 = vadd.f32 %v561, 1.0
        %v583 = vadd.f32 %v563, 1.0
        %v584 = vadd.f32 %v565, 1.0
        %v585 = vadd.f32 %v567, 1.0
        %v586 = vadd.f32 %v569, 1.0
        %v587 = vadd.f32 %v571, 1.0
        %v588 = vrcp.pop %v572
        %v589 = vmul.f32 %v572, %v588
        %v590 = vsub.f32 1.0, %v589
        %v591 = vmul.f32 %v588, %v590
        %v592 = vadd.f32 %v588, %v591
        %vm593 = vweird.f32 %v572
        %vm594 = vweird.f32 %v588
        %vm595 = vmor %vm593, %vm594
        %v596 = vsel %vm595, %v588, %v592
        %v597 = vand.u32 2147483647, %v572
        %vm598 = vcmp.eq.f32.partialorder %v597, 8.507059e+37
        %v599 = vand.u32 %v572, 2147483648
        %v600 = vor.u32 1.1754944e-38, %v599
        %v601 = vsel %vm598, %v600, %v596
        %v602 = vmul.f32 1.0, %v601
        %v603 = vrcp.pop %v573
        %v604 = vmul.f32 %v573, %v603
        %v605 = vsub.f32 1.0, %v604
        %v606 = vmul.f32 %v603, %v605
        %v607 = vadd.f32 %v603, %v606
        %vm608 = vweird.f32 %v573
        %vm609 = vweird.f32 %v603
        %vm610 = vmor %vm608, %vm609
        %v611 = vsel %vm610, %v603, %v607
        %v612 = vand.u32 2147483647, %v573
        %vm613 = vcmp.eq.f32.partialorder %v612, 8.507059e+37
        %v614 = vand.u32 %v573, 2147483648
        %v615 = vor.u32 1.1754944e-38, %v614
        %v616 = vsel %vm613, %v615, %v611
        %v617 = vmul.f32 1.0, %v616
        %v618 = vrcp.pop %v574
        %v619 = vmul.f32 %v574, %v618
        %v620 = vsub.f32 1.0, %v619
        %v621 = vmul.f32 %v618, %v620
        %v622 = vadd.f32 %v618, %v621
        %vm623 = vweird.f32 %v574
        %vm624 = vweird.f32 %v618
        %vm625 = vmor %vm623, %vm624
        %v626 = vsel %vm625, %v618, %v622
        %v627 = vand.u32 2147483647, %v574
        %vm628 = vcmp.eq.f32.partialorder %v627, 8.507059e+37
        %v629 = vand.u32 %v574, 2147483648
        %v630 = vor.u32 1.1754944e-38, %v629
        %v631 = vsel %vm628, %v630, %v626
        %v632 = vmul.f32 1.0, %v631
        %v633 = vrcp.pop %v575
        %v634 = vmul.f32 %v575, %v633
        %v635 = vsub.f32 1.0, %v634
        %v636 = vmul.f32 %v633, %v635
        %v637 = vadd.f32 %v633, %v636
        %vm638 = vweird.f32 %v575
        %vm639 = vweird.f32 %v633
        %vm640 = vmor %vm638, %vm639
        %v641 = vsel %vm640, %v633, %v637
        %v642 = vand.u32 2147483647, %v575
        %vm643 = vcmp.eq.f32.partialorder %v642, 8.507059e+37
        %v644 = vand.u32 %v575, 2147483648
        %v645 = vor.u32 1.1754944e-38, %v644
        %v646 = vsel %vm643, %v645, %v641
        %v647 = vmul.f32 1.0, %v646
        %v648 = vrcp.pop %v576
        %v649 = vmul.f32 %v576, %v648
        %v650 = vsub.f32 1.0, %v649
        %v651 = vmul.f32 %v648, %v650
        %v652 = vadd.f32 %v648, %v651
        %vm653 = vweird.f32 %v576
        %vm654 = vweird.f32 %v648
        %vm655 = vmor %vm653, %vm654
        %v656 = vsel %vm655, %v648, %v652
        %v657 = vand.u32 2147483647, %v576
        %vm658 = vcmp.eq.f32.partialorder %v657, 8.507059e+37
        %v659 = vand.u32 %v576, 2147483648
        %v660 = vor.u32 1.1754944e-38, %v659
        %v661 = vsel %vm658, %v660, %v656
        %v662 = vmul.f32 1.0, %v661
        %v663 = vrcp.pop %v577
        %v664 = vmul.f32 %v577, %v663
        %v665 = vsub.f32 1.0, %v664
        %v666 = vmul.f32 %v663, %v665
        %v667 = vadd.f32 %v663, %v666
        %vm668 = vweird.f32 %v577
        %vm669 = vweird.f32 %v663
        %vm670 = vmor %vm668, %vm669
        %v671 = vsel %vm670, %v663, %v667
        %v672 = vand.u32 2147483647, %v577
        %vm673 = vcmp.eq.f32.partialorder %v672, 8.507059e+37
        %v674 = vand.u32 %v577, 2147483648
        %v675 = vor.u32 1.1754944e-38, %v674
        %v676 = vsel %vm673, %v675, %v671
        %v677 = vmul.f32 1.0, %v676
        %v678 = vrcp.pop %v578
        %v679 = vmul.f32 %v578, %v678
        %v680 = vsub.f32 1.0, %v679
        %v681 = vmul.f32 %v678, %v680
        %v682 = vadd.f32 %v678, %v681
        %vm683 = vweird.f32 %v578
        %vm684 = vweird.f32 %v678
        %vm685 = vmor %vm683, %vm684
        %v686 = vsel %vm685, %v678, %v682
        %v687 = vand.u32 2147483647, %v578
        %vm688 = vcmp.eq.f32.partialorder %v687, 8.507059e+37
        %v689 = vand.u32 %v578, 2147483648
        %v690 = vor.u32 1.1754944e-38, %v689
        %v691 = vsel %vm688, %v690, %v686
        %v692 = vmul.f32 1.0, %v691
        %v693 = vrcp.pop %v579
        %v694 = vmul.f32 %v579, %v693
        %v695 = vsub.f32 1.0, %v694
        %v696 = vmul.f32 %v693, %v695
        %v697 = vadd.f32 %v693, %v696
        %vm698 = vweird.f32 %v579
        %vm699 = vweird.f32 %v693
        %vm700 = vmor %vm698, %vm699
        %v701 = vsel %vm700, %v693, %v697
        %v702 = vand.u32 2147483647, %v579
        %vm703 = vcmp.eq.f32.partialorder %v702, 8.507059e+37
        %v704 = vand.u32 %v579, 2147483648
        %v705 = vor.u32 1.1754944e-38, %v704
        %v706 = vsel %vm703, %v705, %v701
        %v707 = vmul.f32 1.0, %v706
        %v708 = vrcp.pop %v580
        %v709 = vmul.f32 %v580, %v708
        %v710 = vsub.f32 1.0, %v709
        %v711 = vmul.f32 %v708, %v710
        %v712 = vadd.f32 %v708, %v711
        %vm713 = vweird.f32 %v580
        %vm714 = vweird.f32 %v708
        %vm715 = vmor %vm713, %vm714
        %v716 = vsel %vm715, %v708, %v712
        %v717 = vand.u32 2147483647, %v580
        %vm718 = vcmp.eq.f32.partialorder %v717, 8.507059e+37
        %v719 = vand.u32 %v580, 2147483648
        %v720 = vor.u32 1.1754944e-38, %v719
        %v721 = vsel %vm718, %v720, %v716
        %v722 = vmul.f32 1.0, %v721
        %v723 = vrcp.pop %v581
        %v724 = vmul.f32 %v581, %v723
        %v725 = vsub.f32 1.0, %v724
        %v726 = vmul.f32 %v723, %v725
        %v727 = vadd.f32 %v723, %v726
        %vm728 = vweird.f32 %v581
        %vm729 = vweird.f32 %v723
        %vm730 = vmor %vm728, %vm729
        %v731 = vsel %vm730, %v723, %v727
        %v732 = vand.u32 2147483647, %v581
        %vm733 = vcmp.eq.f32.partialorder %v732, 8.507059e+37
        %v734 = vand.u32 %v581, 2147483648
        %v735 = vor.u32 1.1754944e-38, %v734
        %v736 = vsel %vm733, %v735, %v731
        %v737 = vmul.f32 1.0, %v736
        %v738 = vrcp.pop %v582
        %v739 = vmul.f32 %v582, %v738
        %v740 = vsub.f32 1.0, %v739
        %v741 = vmul.f32 %v738, %v740
        %v742 = vadd.f32 %v738, %v741
        %vm743 = vweird.f32 %v582
        %vm744 = vweird.f32 %v738
        %vm745 = vmor %vm743, %vm744
        %v746 = vsel %vm745, %v738, %v742
        %v747 = vand.u32 2147483647, %v582
        %vm748 = vcmp.eq.f32.partialorder %v747, 8.507059e+37
        %v749 = vand.u32 %v582, 2147483648
        %v750 = vor.u32 1.1754944e-38, %v749
        %v751 = vsel %vm748, %v750, %v746
        %v752 = vmul.f32 1.0, %v751
        %v753 = vrcp.pop %v583
        %v754 = vmul.f32 %v583, %v753
        %v755 = vsub.f32 1.0, %v754
        %v756 = vmul.f32 %v753, %v755
        %v757 = vadd.f32 %v753, %v756
        %vm758 = vweird.f32 %v583
        %vm759 = vweird.f32 %v753
        %vm760 = vmor %vm758, %vm759
        %v761 = vsel %vm760, %v753, %v757
        %v762 = vand.u32 2147483647, %v583
        %vm763 = vcmp.eq.f32.partialorder %v762, 8.507059e+37
        %v764 = vand.u32 %v583, 2147483648
        %v765 = vor.u32 1.1754944e-38, %v764
        %v766 = vsel %vm763, %v765, %v761
        %v767 = vmul.f32 1.0, %v766
        %v768 = vrcp.pop %v584
        %v769 = vmul.f32 %v584, %v768
        %v770 = vsub.f32 1.0, %v769
        %v771 = vmul.f32 %v768, %v770
        %v772 = vadd.f32 %v768, %v771
        %vm773 = vweird.f32 %v584
        %vm774 = vweird.f32 %v768
        %vm775 = vmor %vm773, %vm774
        %v776 = vsel %vm775, %v768, %v772
        %v777 = vand.u32 2147483647, %v584
        %vm778 = vcmp.eq.f32.partialorder %v777, 8.507059e+37
        %v779 = vand.u32 %v584, 2147483648
        %v780 = vor.u32 1.1754944e-38, %v779
        %v781 = vsel %vm778, %v780, %v776
        %v782 = vmul.f32 1.0, %v781
        %v783 = vrcp.pop %v585
        %v784 = vmul.f32 %v585, %v783
        %v785 = vsub.f32 1.0, %v784
        %v786 = vmul.f32 %v783, %v785
        %v787 = vadd.f32 %v783, %v786
        %vm788 = vweird.f32 %v585
        %vm789 = vweird.f32 %v783
        %vm790 = vmor %vm788, %vm789
        %v791 = vsel %vm790, %v783, %v787
        %v792 = vand.u32 2147483647, %v585
        %vm793 = vcmp.eq.f32.partialorder %v792, 8.507059e+37
        %v794 = vand.u32 %v585, 2147483648
        %v795 = vor.u32 1.1754944e-38, %v794
        %v796 = vsel %vm793, %v795, %v791
        %v797 = vmul.f32 1.0, %v796
        %v798 = vrcp.pop %v586
        %v799 = vmul.f32 %v586, %v798
        %v800 = vsub.f32 1.0, %v799
        %v801 = vmul.f32 %v798, %v800
        %v802 = vadd.f32 %v798, %v801
        %vm803 = vweird.f32 %v586
        %vm804 = vweird.f32 %v798
        %vm805 = vmor %vm803, %vm804
        %v806 = vsel %vm805, %v798, %v802
        %v807 = vand.u32 2147483647, %v586
        %vm808 = vcmp.eq.f32.partialorder %v807, 8.507059e+37
        %v809 = vand.u32 %v586, 2147483648
        %v810 = vor.u32 1.1754944e-38, %v809
        %v811 = vsel %vm808, %v810, %v806
        %v812 = vmul.f32 1.0, %v811
        %v813 = vrcp.pop %v587
        %v814 = vmul.f32 %v587, %v813
        %v815 = vsub.f32 1.0, %v814
        %v816 = vmul.f32 %v813, %v815
        %v817 = vadd.f32 %v813, %v816
        %vm818 = vweird.f32 %v587
        %vm819 = vweird.f32 %v813
        %vm820 = vmor %vm818, %vm819
        %v821 = vsel %vm820, %v813, %v817
        %v822 = vand.u32 2147483647, %v587
        %vm823 = vcmp.eq.f32.partialorder %v822, 8.507059e+37
        %v824 = vand.u32 %v587, 2147483648
        %v825 = vor.u32 1.1754944e-38, %v824
        %v826 = vsel %vm823, %v825, %v821
        %v827 = vmul.f32 1.0, %v826
        %v828 = vmul.f32 %v476, %v602
        %v829 = vmul.f32 %v505, %v617
        %v830 = vmul.f32 %v478, %v632
        %v831 = vmul.f32 %v507, %v647
        %v832 = vmul.f32 %v481, %v662
        %v833 = vmul.f32 %v510, %v677
        %v834 = vmul.f32 %v483, %v692
        %v835 = vmul.f32 %v512, %v707
        %v836 = vmul.f32 %v486, %v722
        %v837 = vmul.f32 %v515, %v737
        %v838 = vmul.f32 %v488, %v752
        %v839 = vmul.f32 %v517, %v767
        %v840 = vmul.f32 %v491, %v782
        %v841 = vmul.f32 %v520, %v797
        %v842 = vmul.f32 %v493, %v812
        %v843 = vmul.f32 %v522, %v827
        %v844 = vpack.c.bf16 %v830, %v828
        %v845 = vpack.c.bf16 %v831, %v829
        %v846 = vpack.c.bf16 %v834, %v832
        %v847 = vpack.c.bf16 %v835, %v833
        %v848 = vpack.c.bf16 %v838, %v836
        %v849 = vpack.c.bf16 %v839, %v837
        %v850 = vpack.c.bf16 %v842, %v840
        %v851 = vpack.c.bf16 %v843, %v841
        %v852 = vld [vmem:[%s3] sm:$0xf]
        %v853 = vld [vmem:[%s3 + $0x4] sm:$0xf]
        %v854 = vld [vmem:[%s3 + $0x8] sm:$0xf]
        %v855 = vld [vmem:[%s3 + $0xc] sm:$0xf]
        %v856 = vld [vmem:[%s4] sm:$0xff]
        %v857 = vld [vmem:[%s4 + $0x8] sm:$0xff]
        %v858 = vld [vmem:[%s4 + $0x10] sm:$0xff]
        %v859 = vld [vmem:[%s4 + $0x18] sm:$0xff]
        %861 = vset.pattern.permute.xlu0 0
        %862 = vperm.xlu0 %861, %v856
        %v863 = vpop.permute.xlu0 %862
        %866 = vset.pattern.permute.xlu0 0
        %867 = vperm.xlu0 %866, %v857
        %v868 = vpop.permute.xlu0 %867
        %871 = vset.pattern.permute.xlu0 0
        %872 = vperm.xlu0 %871, %v858
        %v873 = vpop.permute.xlu0 %872
        %876 = vset.pattern.permute.xlu0 0
        %877 = vperm.xlu0 %876, %v859
        %v878 = vpop.permute.xlu0 %877
        %v884 = vunpack.c.l.b16 %v852
        %v885 = vunpack.c.l.b16 %v853
        %v886 = vunpack.c.l.b16 %v854
        %v887 = vunpack.c.l.b16 %v855
        %v888 = vpack.c.b16 %v885, %v884
        %v889 = vpack.c.b16 %v887, %v886
        %vm890 = vcmask 523264
        %v892 = vsel %vm890, %v888, 0
        %v895 = vsel %vm890, %v889, 0
        %897 = vmatpush.bf16.msra.mxu0 0
        %898 = vmatpush.bf16.msra.mxu0 0
        %899 = vmatpush.bf16.msra.mxu0 0
        %900 = vmatpush.bf16.msra.mxu0 0
        %901 = vmatpush.bf16.msra.mxu0 %v850
        %902 = vmatpush.bf16.msra.mxu0 %v848
        %903 = vmatpush.bf16.msra.mxu0 %v846
        %904 = vmatpush.bf16.msra.mxu0 %v844
        %905 = vmatmul.bf16.gmra.mxu0 %v892
        %v906 = vpop.f32.mrf.mxu0
        %v907 = vadd.f32 %v863, %v906
        %v908 = vpop.f32.mrf.mxu0
        %v909 = vadd.f32 %v868, %v908
        %910 = vmatmul.bf16.gmra.mxu0 %v895
        %v911 = vpop.f32.mrf.mxu0
        %v912 = vadd.f32 %v873, %v911
        %v913 = vpop.f32.mrf.mxu0
        %v914 = vadd.f32 %v878, %v913
        %915 = vdwg.mxu0
        %916 = vmatpush.bf16.msra.mxu0 0
        %917 = vmatpush.bf16.msra.mxu0 0
        %918 = vmatpush.bf16.msra.mxu0 0
        %919 = vmatpush.bf16.msra.mxu0 0
        %920 = vmatpush.bf16.msra.mxu0 %v851
        %921 = vmatpush.bf16.msra.mxu0 %v849
        %922 = vmatpush.bf16.msra.mxu0 %v847
        %923 = vmatpush.bf16.msra.mxu0 %v845
        %924 = vmatmul.bf16.gmra.mxu0 %v892
        %v925 = vpop.f32.mrf.mxu0
        %v926 = vadd.f32 %v863, %v925
        %v927 = vpop.f32.mrf.mxu0
        %v928 = vadd.f32 %v868, %v927
        %929 = vmatmul.bf16.gmra.mxu0 %v895
        %v930 = vpop.f32.mrf.mxu0
        %v931 = vadd.f32 %v873, %v930
        %v932 = vpop.f32.mrf.mxu0
        %v933 = vadd.f32 %v878, %v932
        %934 = vdwg.mxu0
        %v935 = vxor.u32 %v907, 2147483648
        %v936 = vxor.u32 %v926, 2147483648
        %v937 = vxor.u32 %v909, 2147483648
        %v938 = vxor.u32 %v928, 2147483648
        %v939 = vxor.u32 %v912, 2147483648
        %v940 = vxor.u32 %v931, 2147483648
        %v941 = vxor.u32 %v914, 2147483648
        %v942 = vxor.u32 %v933, 2147483648
        %v943 = vmul.f32 %v935, 1.442695
        %v944 = vpow.pop %v943
        %v945 = vmul.f32 %v936, 1.442695
        %v946 = vpow.pop %v945
        %v947 = vmul.f32 %v937, 1.442695
        %v948 = vpow.pop %v947
        %v949 = vmul.f32 %v938, 1.442695
        %v950 = vpow.pop %v949
        %v951 = vmul.f32 %v939, 1.442695
        %v952 = vpow.pop %v951
        %v953 = vmul.f32 %v940, 1.442695
        %v954 = vpow.pop %v953
        %v955 = vmul.f32 %v941, 1.442695
        %v956 = vpow.pop %v955
        %v957 = vmul.f32 %v942, 1.442695
        %v958 = vpow.pop %v957
        %v959 = vadd.f32 %v944, 1.0
        %v960 = vadd.f32 %v946, 1.0
        %v961 = vadd.f32 %v948, 1.0
        %v962 = vadd.f32 %v950, 1.0
        %v963 = vadd.f32 %v952, 1.0
        %v964 = vadd.f32 %v954, 1.0
        %v965 = vadd.f32 %v956, 1.0
        %v966 = vadd.f32 %v958, 1.0
        %v967 = vrcp.pop %v959
        %v968 = vmul.f32 %v959, %v967
        %v969 = vsub.f32 1.0, %v968
        %v970 = vmul.f32 %v967, %v969
        %v971 = vadd.f32 %v967, %v970
        %vm972 = vweird.f32 %v959
        %vm973 = vweird.f32 %v967
        %vm974 = vmor %vm972, %vm973
        %v975 = vsel %vm974, %v967, %v971
        %v976 = vand.u32 2147483647, %v959
        %vm977 = vcmp.eq.f32.partialorder %v976, 8.507059e+37
        %v978 = vand.u32 %v959, 2147483648
        %v979 = vor.u32 1.1754944e-38, %v978
        %v980 = vsel %vm977, %v979, %v975
        %v981 = vmul.f32 1.0, %v980
        %v982 = vrcp.pop %v960
        %v983 = vmul.f32 %v960, %v982
        %v984 = vsub.f32 1.0, %v983
        %v985 = vmul.f32 %v982, %v984
        %v986 = vadd.f32 %v982, %v985
        %vm987 = vweird.f32 %v960
        %vm988 = vweird.f32 %v982
        %vm989 = vmor %vm987, %vm988
        %v990 = vsel %vm989, %v982, %v986
        %v991 = vand.u32 2147483647, %v960
        %vm992 = vcmp.eq.f32.partialorder %v991, 8.507059e+37
        %v993 = vand.u32 %v960, 2147483648
        %v994 = vor.u32 1.1754944e-38, %v993
        %v995 = vsel %vm992, %v994, %v990
        %v996 = vmul.f32 1.0, %v995
        %v997 = vrcp.pop %v961
        %v998 = vmul.f32 %v961, %v997
        %v999 = vsub.f32 1.0, %v998
        %v1000 = vmul.f32 %v997, %v999
        %v1001 = vadd.f32 %v997, %v1000
        %vm1002 = vweird.f32 %v961
        %vm1003 = vweird.f32 %v997
        %vm1004 = vmor %vm1002, %vm1003
        %v1005 = vsel %vm1004, %v997, %v1001
        %v1006 = vand.u32 2147483647, %v961
        %vm1007 = vcmp.eq.f32.partialorder %v1006, 8.507059e+37
        %v1008 = vand.u32 %v961, 2147483648
        %v1009 = vor.u32 1.1754944e-38, %v1008
        %v1010 = vsel %vm1007, %v1009, %v1005
        %v1011 = vmul.f32 1.0, %v1010
        %v1012 = vrcp.pop %v962
        %v1013 = vmul.f32 %v962, %v1012
        %v1014 = vsub.f32 1.0, %v1013
        %v1015 = vmul.f32 %v1012, %v1014
        %v1016 = vadd.f32 %v1012, %v1015
        %vm1017 = vweird.f32 %v962
        %vm1018 = vweird.f32 %v1012
        %vm1019 = vmor %vm1017, %vm1018
        %v1020 = vsel %vm1019, %v1012, %v1016
        %v1021 = vand.u32 2147483647, %v962
        %vm1022 = vcmp.eq.f32.partialorder %v1021, 8.507059e+37
        %v1023 = vand.u32 %v962, 2147483648
        %v1024 = vor.u32 1.1754944e-38, %v1023
        %v1025 = vsel %vm1022, %v1024, %v1020
        %v1026 = vmul.f32 1.0, %v1025
        %v1027 = vrcp.pop %v963
        %v1028 = vmul.f32 %v963, %v1027
        %v1029 = vsub.f32 1.0, %v1028
        %v1030 = vmul.f32 %v1027, %v1029
        %v1031 = vadd.f32 %v1027, %v1030
        %vm1032 = vweird.f32 %v963
        %vm1033 = vweird.f32 %v1027
        %vm1034 = vmor %vm1032, %vm1033
        %v1035 = vsel %vm1034, %v1027, %v1031
        %v1036 = vand.u32 2147483647, %v963
        %vm1037 = vcmp.eq.f32.partialorder %v1036, 8.507059e+37
        %v1038 = vand.u32 %v963, 2147483648
        %v1039 = vor.u32 1.1754944e-38, %v1038
        %v1040 = vsel %vm1037, %v1039, %v1035
        %v1041 = vmul.f32 1.0, %v1040
        %v1042 = vrcp.pop %v964
        %v1043 = vmul.f32 %v964, %v1042
        %v1044 = vsub.f32 1.0, %v1043
        %v1045 = vmul.f32 %v1042, %v1044
        %v1046 = vadd.f32 %v1042, %v1045
        %vm1047 = vweird.f32 %v964
        %vm1048 = vweird.f32 %v1042
        %vm1049 = vmor %vm1047, %vm1048
        %v1050 = vsel %vm1049, %v1042, %v1046
        %v1051 = vand.u32 2147483647, %v964
        %vm1052 = vcmp.eq.f32.partialorder %v1051, 8.507059e+37
        %v1053 = vand.u32 %v964, 2147483648
        %v1054 = vor.u32 1.1754944e-38, %v1053
        %v1055 = vsel %vm1052, %v1054, %v1050
        %v1056 = vmul.f32 1.0, %v1055
        %v1057 = vrcp.pop %v965
        %v1058 = vmul.f32 %v965, %v1057
        %v1059 = vsub.f32 1.0, %v1058
        %v1060 = vmul.f32 %v1057, %v1059
        %v1061 = vadd.f32 %v1057, %v1060
        %vm1062 = vweird.f32 %v965
        %vm1063 = vweird.f32 %v1057
        %vm1064 = vmor %vm1062, %vm1063
        %v1065 = vsel %vm1064, %v1057, %v1061
        %v1066 = vand.u32 2147483647, %v965
        %vm1067 = vcmp.eq.f32.partialorder %v1066, 8.507059e+37
        %v1068 = vand.u32 %v965, 2147483648
        %v1069 = vor.u32 1.1754944e-38, %v1068
        %v1070 = vsel %vm1067, %v1069, %v1065
        %v1071 = vmul.f32 1.0, %v1070
        %v1072 = vrcp.pop %v966
        %v1073 = vmul.f32 %v966, %v1072
        %v1074 = vsub.f32 1.0, %v1073
        %v1075 = vmul.f32 %v1072, %v1074
        %v1076 = vadd.f32 %v1072, %v1075
        %vm1077 = vweird.f32 %v966
        %vm1078 = vweird.f32 %v1072
        %vm1079 = vmor %vm1077, %vm1078
        %v1080 = vsel %vm1079, %v1072, %v1076
        %v1081 = vand.u32 2147483647, %v966
        %vm1082 = vcmp.eq.f32.partialorder %v1081, 8.507059e+37
        %v1083 = vand.u32 %v966, 2147483648
        %v1084 = vor.u32 1.1754944e-38, %v1083
        %v1085 = vsel %vm1082, %v1084, %v1080
        %v1086 = vmul.f32 1.0, %v1085
        %v1087 = vmul.f32 %v907, %v981
        %v1088 = vmul.f32 %v926, %v996
        %v1089 = vmul.f32 %v909, %v1011
        %v1090 = vmul.f32 %v928, %v1026
        %v1091 = vmul.f32 %v912, %v1041
        %v1092 = vmul.f32 %v931, %v1056
        %v1093 = vmul.f32 %v914, %v1071
        %v1094 = vmul.f32 %v933, %v1086
        %v1095 = vpack.c.bf16 %v1089, %v1087
        %v1096 = vpack.c.bf16 %v1090, %v1088
        %v1097 = vpack.c.bf16 %v1093, %v1091
        %v1098 = vpack.c.bf16 %v1094, %v1092
        %v1099 = vld [vmem:[%s5] sm:$0xf]
        %v1100 = vld [vmem:[%s5 + $0x4] sm:$0xf]
        %v1101 = vld [vmem:[%s6] sm:$0xff]
        %v1102 = vld [vmem:[%s6 + $0x8] sm:$0xff]
        %1104 = vset.pattern.permute.xlu0 0
        %1105 = vperm.xlu0 %1104, %v1101
        %v1106 = vpop.permute.xlu0 %1105
        %1109 = vset.pattern.permute.xlu0 0
        %1110 = vperm.xlu0 %1109, %v1102
        %v1111 = vpop.permute.xlu0 %1110
        %v1115 = vunpack.c.l.b16 %v1099
        %v1116 = vunpack.c.l.b16 %v1100
        %v1117 = vpack.c.b16 %v1116, %v1115
        %v1119 = vsel %vm405, %v1117, 0
        %1121 = vmatpush.bf16.msra.mxu0 0
        %1122 = vmatpush.bf16.msra.mxu0 0
        %1123 = vmatpush.bf16.msra.mxu0 0
        %1124 = vmatpush.bf16.msra.mxu0 0
        %1125 = vmatpush.bf16.msra.mxu0 0
        %1126 = vmatpush.bf16.msra.mxu0 0
        %1127 = vmatpush.bf16.msra.mxu0 %v1097
        %1128 = vmatpush.bf16.msra.mxu0 %v1095
        %1129 = vmatmul.bf16.gmra.mxu0 %v1119
        %v1130 = vpop.f32.mrf.mxu0
        %v1131 = vadd.f32 %v1106, %v1130
        %v1132 = vpop.f32.mrf.mxu0
        %v1133 = vadd.f32 %v1111, %v1132
        %1134 = vdwg.mxu0
        %1135 = vmatpush.bf16.msra.mxu0 0
        %1136 = vmatpush.bf16.msra.mxu0 0
        %1137 = vmatpush.bf16.msra.mxu0 0
        %1138 = vmatpush.bf16.msra.mxu0 0
        %1139 = vmatpush.bf16.msra.mxu0 0
        %1140 = vmatpush.bf16.msra.mxu0 0
        %1141 = vmatpush.bf16.msra.mxu0 %v1098
        %1142 = vmatpush.bf16.msra.mxu0 %v1096
        %1143 = vmatmul.bf16.gmra.mxu0 %v1119
        %v1144 = vpop.f32.mrf.mxu0
        %v1145 = vadd.f32 %v1106, %v1144
        %v1146 = vpop.f32.mrf.mxu0
        %v1147 = vadd.f32 %v1111, %v1146
        %1148 = vdwg.mxu0
        %1149 = vst [vmem:[%s272] sm:$0xff] %v1131
        %1150 = vst [vmem:[%s272 + $0x8] sm:$0xff] %v1145
        %1151 = vst [vmem:[%s272 + $0x10] sm:$0xff] %v1133
        %1152 = vst [vmem:[%s272 + $0x18] sm:$0xff] %v1147
        %s1153 = sand.u32 %s181, 1
        %s1154 = scalar_lea.sflag [#allocation3], %s1153
        %s1155 = sand.u32 %s181, 1
        %s1156 = smul.addr %s1155, 32
        %s1157 = scalar_lea.vmem [#allocation2], %s1156
        // Predicated region
        $region49: #{tpu_custom_call.1} parent=47 // pred_check
          %p1158 = pneg %p191
        $region50: #{tpu_custom_call.1} parent=47 // pred_check_branch
          %1160 = sbr.rel (%p1158) target = $region52
        $region51: #{tpu_custom_call.1} parent=47 // pred_region
          %s1161 = smul.u32 2, %s21
          %1163 = vsyncadd %s1154, 0
          %s1164 = smul.addr %s1161, 8
          %s1165 = scalar_lea.hbm %s7, %s1164
          %s1166 = sshll.u32 %s1157, 4
          %s1167 = int_to_ptr.vmem [resolvable:$true] %s1166
          %s1168 = sshll.u32 %s1165, 4
          %s1169 = int_to_ptr.hbm [resolvable:$true] %s1168
          %1174 = dma.vmem_to_hbm [thread:$0]  %s1167, 512, %s1169, %s1154, 256, 512, 16
        $region52: #{tpu_custom_call.1} parent=47 // pred_fallthru
          _
      $region48: #{tpu_custom_call.1} parent=5 // pred_fallthru
        _
      %p1175 = scmp.le.s32.totalorder 2, %s16
      // Predicated region
      $region53: #{tpu_custom_call.1} parent=5 // pred_check
        %p1176 = pneg %p1175
      $region54: #{tpu_custom_call.1} parent=5 // pred_check_branch
        %1178 = sbr.rel (%p1176) target = $region56
      $region55: #{tpu_custom_call.1} parent=5 // pred_region
        %s1179 = ssub.s32 %s16, 2
        // Predicated region
        $region57: #{tpu_custom_call.1} parent=55 // pred_check
          %p1180 = pneg %p197
        $region58: #{tpu_custom_call.1} parent=55 // pred_check_branch
          %1182 = sbr.rel (%p1180) target = $region60
        $region59: #{tpu_custom_call.1} parent=55 // pred_region
          %s1183 = sand.u32 %s182, 1
          %s1184 = scalar_lea.sflag [#allocation3], %s1183
          %s1185 = sand.u32 %s182, 1
          %s1186 = smul.addr %s1185, 32
          %s1187 = scalar_lea.vmem [#allocation2], %s1186
          %1189 = dma.done %s1184, 512
        $region60: #{tpu_custom_call.1} parent=55 // pred_fallthru
          _
      $region56: #{tpu_custom_call.1} parent=5 // pred_fallthru
        _
    $region6: #{tpu_custom_call.1} parent=1 // loop_footer
      %s20 = sadd.s32 1, %s16
    $region7: #{tpu_custom_call.1} parent=1 // loop_footer_branch
      %15 = sbr.rel target = $region3
    $region8: #{tpu_custom_call.1} parent=1 // loop_exit
      _
    %1190 = vsyncpa [#allocation3], 1
    %s1191 = scalar_lea.sflag [#allocation3], 1
    %1192 = vsyncpa %s1191, 1

</llo_original>
